<compile_context>
chip_gen: v5e
topology: v5e:2x2
jax: 0.10.0
libtpu: 0.0.40
codegen_flags: <defaults>
</compile_context>

<pallas_src>
import functools
import math

import jax
import jax.numpy as jnp
from jax.experimental import pallas as pl
from jax.experimental.pallas import tpu as pltpu

MIB = 2 ** 20
MATMUL_VMEM_BUDGET = 36 * MIB   # explicit working-set cap for the tile search
FUSED_VMEM_BUDGET = 40 * MIB
VMEM_LIMIT_CAP = 56 * MIB       # stays below v7x's 64 MiB VMEM per TensorCore


def _round_up(x, m):
    return ((x + m - 1) // m) * m


# ----------------------------------------------------------------------------
# Kernel 1: fused 3x3 conv (in-kernel halo im2col) + BN affine + ReLU
# ----------------------------------------------------------------------------
def _conv3x3_kernel(x_ref, w_ref, s_ref, b_ref, o_ref, *, th, W, cin, relu):
    x = x_ref[0]                                    # (th+2, W+2, cin) bf16
    tc = o_ref.shape[-1]
    acc = jnp.zeros((th * W, tc), jnp.float32)
    for dy in range(3):                             # 9 taps unrolled; each is a
        for dx in range(3):                         # shifted slice of the halo
            xa = x[dy:dy + th, dx:dx + W, :].reshape(th * W, cin)
            wk = w_ref[pl.ds((dy * 3 + dx) * cin, cin), :]
            acc = acc + jnp.dot(xa, wk, preferred_element_type=jnp.float32)
    y = acc * s_ref[...] + b_ref[...]
    if relu:
        y = jnp.maximum(y, 0.0)
    o_ref[0] = y.reshape(th, W, tc).astype(o_ref.dtype)


def _choose_conv_tiles(h, w, cin, cout):
    """Pick (row-block th, cout tile tc) for the fused conv, or None -> fallback."""
    if h < 8 or w < 8 or (h % 8) or (w % 8):
        return None
    th_cands = ([h] if h * w <= 2048 else [])
    th_cands += [c for c in (64, 32, 16, 8) if h % c == 0 and c < h]
    tc_cands = ([cout] if cout <= 512 else [])
    tc_cands += [c for c in (512, 256, 128) if cout % c == 0 and c < cout]
    for th in th_cands:
        for tc in tc_cands:
            rows = th * w
            est = (2 * (th + 2) * (w + 2) * cin * 2   # halo block (dbl-buffered)
                   + 2 * 9 * cin * tc * 2             # weight block (dbl-buffered)
                   + 2 * rows * tc * 2                # output block (dbl-buffered)
                   + rows * tc * 4                    # f32 accumulator value
                   + rows * cin * 2 * 2               # shifted-tap temporaries
                   + 4 * tc * 4)
            if est <= FUSED_VMEM_BUDGET:
                return th, tc, est
    return None


def conv3x3_fused(x, p, relu=True):
    """Fused conv path; returns None when shapes call for the im2col fallback."""
    n, h, w, cin = x.shape
    cout = p['scale'].shape[-1]
    tiles = _choose_conv_tiles(h, w, cin, cout)
    if tiles is None:
        return None
    th, tc, est = tiles
    nb = h // th

    xp = jnp.pad(x.astype(jnp.bfloat16), ((0, 0), (1, 1), (1, 1), (0, 0)))
    if nb == 1:
        xh = xp                                       # no halo duplication at all
    else:
        # Halo-duplicating row gather: ~(th+2)/th HBM overhead vs 9x for im2col.
        row = (jnp.arange(nb) * th)[:, None] + jnp.arange(th + 2)[None, :]
        xh = xp[:, row].reshape(n * nb, th + 2, w + 2, cin)

    grid = (n * nb, cout // tc)                       # both axes parallel (v7x)
    vmem_limit = int(min(VMEM_LIMIT_CAP, max(est + 8 * MIB, 24 * MIB)))

    out = pl.pallas_call(
        functools.partial(_conv3x3_kernel, th=th, W=w, cin=cin, relu=relu),
        out_shape=jax.ShapeDtypeStruct((n * nb, th, w, cout), jnp.bfloat16),
        grid_spec=pltpu.PrefetchScalarGridSpec(
            num_scalar_prefetch=0,
            grid=grid,
            in_specs=[
                pl.BlockSpec((1, th + 2, w + 2, cin), lambda i, j: (i, 0, 0, 0)),
                pl.BlockSpec((9 * cin, tc), lambda i, j: (0, j)),
                pl.BlockSpec((1, tc), lambda i, j: (0, j)),
                pl.BlockSpec((1, tc), lambda i, j: (0, j)),
            ],
            out_specs=pl.BlockSpec((1, th, w, tc), lambda i, j: (i, 0, 0, j)),
        ),
        compiler_params=pltpu.CompilerParams(
            dimension_semantics=("parallel", "parallel"),
            vmem_limit_bytes=vmem_limit),
    )(xh, p['w'], p['scale'], p['bias'])
    return out.reshape(n, h, w, cout)


# ----------------------------------------------------------------------------
# Kernel 2: tiled bf16 matmul + per-channel affine (+ optional ReLU)
# ----------------------------------------------------------------------------
def _mm_affine_kernel(x_ref, w_ref, s_ref, b_ref, o_ref, acc_ref, *, relu):
    @pl.when(pl.program_id(2) == 0)
    def _():
        acc_ref[...] = jnp.zeros_like(acc_ref)

    acc_ref[...] += jnp.dot(x_ref[...], w_ref[...],
                            preferred_element_type=jnp.float32)

    @pl.when(pl.program_id(2) == pl.num_programs(2) - 1)
    def _():
        y = acc_ref[...] * s_ref[...] + b_ref[...]
        if relu:
            y = jnp.maximum(y, 0.0)
        o_ref[...] = y.astype(o_ref.dtype)


def _mm_tiles(Mp, K, N, out_bytes):
    """Search (tm, tn, tk) minimising modelled HBM traffic under a VMEM budget."""
    tm_cands = [c for c in (4096, 2048, 1024, 512, 256, 128, 64, 32, 16)
                if c <= Mp and Mp % c == 0]
    if Mp not in tm_cands:
        tm_cands.append(Mp)
    tk_cands = [K] + [c for c in (2048, 1024, 512, 256, 128)
                      if c < K and K % c == 0]
    tn_cands = [N] + [c for c in (1024, 512, 256, 128)
                      if c < N and N % c == 0]
    best, best_key = None, None
    for tk in tk_cands:
        for tn in tn_cands:
            for tm in tm_cands:
                ws = (2 * (tm * tk + tk * tn) * 2 + 2 * tm * tn * out_bytes
                      + tm * tn * 4 + 4 * tn * 4)
                if ws > MATMUL_VMEM_BUDGET:
                    continue
                gi, gj, gk = Mp // tm, N // tn, K // tk
                # Pallas skips the re-fetch when a block index is unchanged
                # between consecutive grid steps -> full-K/full-N operands are
                # DMA'd exactly once even when the other axes iterate.
                x_traf = Mp * K * 2 * (gj if gk > 1 else 1)
                w_traf = K * N * 2 * (gi if (gj > 1 or gk > 1) else 1)
                traf = x_traf + w_traf + Mp * N * out_bytes
                key = (traf, gi * gj * gk, -(tm * tn), -tk)
                if best_key is None or key < best_key:
                    best, best_key = (tm, tn, tk, ws), key
    assert best is not None
    return best


def matmul_affine(x, lin, relu, out_dtype=jnp.bfloat16):
    """maybe_relu((x @ w) * scale + bias); bf16 operands, f32 accumulation."""
    w, scale, bias = lin['w'], lin['scale'], lin['bias']
    M, K = x.shape
    Kw, N = w.shape
    assert K == Kw, (K, Kw)

    # Never let the M tile degenerate to 8 rows: pad M to a multiple of 16
    # (bf16 sublane packing) and, for large M, of 256 (MXU-sized row blocks).
    Mp = _round_up(M, 256 if M >= 1024 else 16)
    xb = x.astype(jnp.bfloat16)
    if Mp != M:
        xb = jnp.pad(xb, ((0, Mp - M), (0, 0)))

    out_bytes = jnp.dtype(out_dtype).itemsize
    tm, tn, tk, ws = _mm_tiles(Mp, K, N, out_bytes)

    # v7x has 2 TensorCores sharded over parallel grid axes: guarantee >=2
    # parallel blocks when it is free (operand traffic is unchanged).
    gi, gj = Mp // tm, N // tn
    if gi == 1 and gj == 1:
        if tn % 256 == 0:
            tn //= 2
        elif tm % 32 == 0:
            tm //= 2

    grid = (Mp // tm, N // tn, K // tk)
    vmem_limit = int(min(VMEM_LIMIT_CAP, max(ws + 8 * MIB, 24 * MIB)))

    out = pl.pallas_call(
        functools.partial(_mm_affine_kernel, relu=relu),
        out_shape=jax.ShapeDtypeStruct((Mp, N), out_dtype),
        grid_spec=pltpu.PrefetchScalarGridSpec(
            num_scalar_prefetch=0,
            grid=grid,
            in_specs=[
                pl.BlockSpec((tm, tk), lambda i, j, k: (i, k)),
                pl.BlockSpec((tk, tn), lambda i, j, k: (k, j)),
                # (1, tn) blocks keyed on j: re-fetched only when j changes,
                # so scale/bias are effectively resident.
                pl.BlockSpec((1, tn), lambda i, j, k: (0, j)),
                pl.BlockSpec((1, tn), lambda i, j, k: (0, j)),
            ],
            out_specs=pl.BlockSpec((tm, tn), lambda i, j, k: (i, j)),
            scratch_shapes=[pltpu.VMEM((tm, tn), jnp.float32)],
        ),
        compiler_params=pltpu.CompilerParams(
            dimension_semantics=("parallel", "parallel", "arbitrary"),
            vmem_limit_bytes=vmem_limit),
    )(xb, w, scale, bias)

    if Mp != M:
        out = out[:M]
    return out


# ----------------------------------------------------------------------------
# UNet building blocks (NHWC, bf16 activations)
# ----------------------------------------------------------------------------
def conv3x3_bn_relu(x, p, force_fallback=False):
    """Conv2d(3x3, pad=1, bias=False) + folded BatchNorm + ReLU."""
    n, h, w, cin = x.shape
    if not force_fallback:
        out = conv3x3_fused(x, p, relu=True)
        if out is not None:
            return out
    # Fallback for tiny / misaligned spatial sizes: im2col + fused matmul.
    xp = jnp.pad(x, ((0, 0), (1, 1), (1, 1), (0, 0)))
    patches = jnp.concatenate(
        [xp[:, dy:dy + h, dx:dx + w, :] for dy in range(3) for dx in range(3)],
        axis=-1)
    out = matmul_affine(patches.reshape(n * h * w, 9 * cin), p, relu=True)
    return out.reshape(n, h, w, -1)


def double_conv(x, p):
    return conv3x3_bn_relu(conv3x3_bn_relu(x, p['c1']), p['c2'])


def maxpool2(x):
    # TODO(synk): fuse this 2x2 max into the producing conv's epilogue.
    n, h, w, c = x.shape
    return x.reshape(n, h // 2, 2, w // 2, 2, c).max(axis=(2, 4))


def up_transpose2x2(x, p):
    """ConvTranspose2d(kernel=2, stride=2) as one matmul + spatial interleave."""
    n, h, w, cin = x.shape
    cout = p['scale'].shape[-1] // 4
    y = matmul_affine(x.reshape(n * h * w, cin), p, relu=False)
    # TODO(synk): emit the 4 (ky,kx) column groups to interleaved output rows
    #             via the output index_map to drop this strided HBM relayout.
    y = y.reshape(n, h, w, 2, 2, cout).transpose(0, 1, 3, 2, 4, 5)
    return y.reshape(n, 2 * h, 2 * w, cout)


def up_block(x_small, x_skip, p):
    xu = up_transpose2x2(x_small, p['up'])
    # spatial sizes always match here (powers of two), so torch's F.pad is a no-op
    # TODO(synk): split the first conv's K reduction into (skip, upsampled)
    #             segments to avoid materializing this concat in HBM.
    x = jnp.concatenate([x_skip, xu], axis=-1)   # torch.cat([x2, x1], dim=1)
    return double_conv(x, p['dc'])


def out_conv(x, p):
    n, h, w, cin = x.shape
    y = matmul_affine(x.reshape(n * h * w, cin), p, relu=False,
                      out_dtype=jnp.float32)
    return y.reshape(n, h, w, -1)


# ----------------------------------------------------------------------------
# Deterministic parameter init (synthetic; matches the PyTorch module's shapes)
# ----------------------------------------------------------------------------
def _make_linear(w, scale, bias):
    n = w.shape[1]
    return {'w': w.astype(jnp.bfloat16),
            'scale': scale.reshape(1, n).astype(jnp.float32),
            'bias': bias.reshape(1, n).astype(jnp.float32)}


def _init_conv_bn(key, cin, cout):
    kw, kg, kb, km, kv = jax.random.split(key, 5)
    w = jax.random.normal(kw, (cout, cin, 3, 3), jnp.float32) / math.sqrt(9 * cin)
    gamma = 1.0 + 0.1 * jax.random.normal(kg, (cout,), jnp.float32)
    beta = 0.1 * jax.random.normal(kb, (cout,), jnp.float32)
    mean = 0.1 * jax.random.normal(km, (cout,), jnp.float32)
    var = 1.0 + 0.1 * jnp.abs(jax.random.normal(kv, (cout,), jnp.float32))
    scale = gamma * jax.lax.rsqrt(var + 1e-5)
    bias = beta - mean * scale
    # matmul / fused-conv weight layout: [(ky, kx, cin), cout]
    w2 = jnp.transpose(w, (2, 3, 1, 0)).reshape(9 * cin, cout)
    return _make_linear(w2, scale, bias)


def _init_double_conv(key, cin, cout, mid=None):
    mid = cout if mid is None else mid
    k1, k2 = jax.random.split(key)
    return {'c1': _init_conv_bn(k1, cin, mid), 'c2': _init_conv_bn(k2, mid, cout)}


def _init_up(key, cin, cout):
    # ConvTranspose2d(cin, cin // 2, kernel=2, stride=2) + DoubleConv(cin, cout)
    ku, kb, kd = jax.random.split(key, 3)
    ct_out = cin // 2
    wt = jax.random.normal(ku, (cin, ct_out, 2, 2), jnp.float32) / math.sqrt(4 * cin)
    b = 0.01 * jax.random.normal(kb, (ct_out,), jnp.float32)
    # matmul weight layout: [cin, (ky, kx, cout)]
    w2 = jnp.transpose(wt, (0, 2, 3, 1)).reshape(cin, 4 * ct_out)
    return {
        'up': _make_linear(w2, jnp.ones((4 * ct_out,), jnp.float32), jnp.tile(b, 4)),
        'dc': _init_double_conv(kd, cin, cout),
    }


def _init_out(key, cin, cout):
    kw, kb = jax.random.split(key)
    w = jax.random.normal(kw, (cout, cin, 1, 1), jnp.float32) / math.sqrt(cin)
    b = 0.01 * jax.random.normal(kb, (cout,), jnp.float32)
    return _make_linear(w.reshape(cout, cin).T, jnp.ones((cout,), jnp.float32), b)


def init_unet(key, n_channels, bilinear=False):
    assert not bilinear, "bilinear=False path implemented (module default)"
    ks = jax.random.split(key, 11)
    return {
        'inc':      _init_double_conv(ks[0], n_channels, 64, mid=32),
        'inc_mask': _init_double_conv(ks[1], 1, 64, mid=16),
        'down1':    _init_double_conv(ks[2], 64, 128),
        'down2':    _init_double_conv(ks[3], 128, 256),
        'down3':    _init_double_conv(ks[4], 256, 512),
        'down4':    _init_double_conv(ks[5], 512, 1024),
        'up1':      _init_up(ks[6], 1024, 512),
        'up2':      _init_up(ks[7], 512, 256),
        'up3':      _init_up(ks[8], 256, 128),
        'up4':      _init_up(ks[9], 128, 64),
        'outc':     _init_out(ks[10], 64, n_channels),
    }


# ----------------------------------------------------------------------------
# Full forward pass (PyTorch-compatible NCHW in / NCHW out)
# ----------------------------------------------------------------------------
def unet_forward(params, inp_nchw, mask_nchw):
    inp_f32 = jnp.transpose(inp_nchw, (0, 2, 3, 1)).astype(jnp.float32)
    inp = inp_f32.astype(jnp.bfloat16)
    mask = jnp.transpose(mask_nchw, (0, 2, 3, 1)).astype(jnp.bfloat16)

    x1 = double_conv(inp, params['inc']) + double_conv(mask, params['inc_mask'])
    x2 = double_conv(maxpool2(x1), params['down1'])
    x3 = double_conv(maxpool2(x2), params['down2'])
    x4 = double_conv(maxpool2(x3), params['down3'])
    x5 = double_conv(maxpool2(x4), params['down4'])
    x = up_block(x5, x4, params['up1'])
    x = up_block(x, x3, params['up2'])
    x = up_block(x, x2, params['up3'])
    x = up_block(x, x1, params['up4'])
    x = out_conv(x, params['outc'])          # f32
    x = x + inp_f32                          # residual add in f32
    return jnp.transpose(x, (0, 3, 1, 2))


if __name__ == "__main__":
    key = jax.random.PRNGKey(0)
    pkey, ikey, mkey = jax.random.split(key, 3)

    n_channels = 4
    params = init_unet(pkey, n_channels=n_channels, bilinear=False)

    inp = jax.random.normal(ikey, (2, n_channels, 16, 16), jnp.float32)
    mask = (jax.random.uniform(mkey, (2, 1, 16, 16)) > 0.5).astype(jnp.float32)

    # Cross-check the fused in-kernel-halo conv against the im2col path once.
    x_nhwc = jnp.transpose(inp, (0, 2, 3, 1)).astype(jnp.bfloat16)
    a = conv3x3_bn_relu(x_nhwc, params['inc']['c1'])
    b = conv3x3_bn_relu(x_nhwc, params['inc']['c1'], force_fallback=True)
    diff = float(jnp.max(jnp.abs(a.astype(jnp.float32) - b.astype(jnp.float32))))
    assert diff < 5e-2, diff

    out = jax.jit(unet_forward)(params, inp, mask)
    out = jax.block_until_ready(out)

    assert out.shape == inp.shape, out.shape
    assert out.dtype == jnp.float32
    assert bool(jnp.all(jnp.isfinite(out)))
    print("KERNEL_OK")
</pallas_src>

<mosaic_0001>
module attributes {stable_mosaic.version = 11 : i64} {
  func.func @_conv3x3_kernel(%arg0: i32, %arg1: i32, %arg2: memref<1x18x18x4xbf16, #tpu.memory_space<vmem>>, %arg3: memref<36x32xbf16, #tpu.memory_space<vmem>>, %arg4: memref<1x32xf32, #tpu.memory_space<vmem>>, %arg5: memref<1x32xf32, #tpu.memory_space<vmem>>, %arg6: memref<1x16x16x32xbf16, #tpu.memory_space<vmem>>) attributes {dimension_semantics = [#tpu.dimension_semantics<parallel>, #tpu.dimension_semantics<parallel>], iteration_bounds = array<i64: 2, 1>, scalar_prefetch = 0 : i64, scratch_operands = 0 : i64, tpu.core_type = #tpu.core_type<tc>, window_params = [{transform_indices = @transform_0, window_bounds = array<i64: 1, 18, 18, 4>}, {transform_indices = @transform_1, window_bounds = array<i64: 36, 32>}, {transform_indices = @transform_2, window_bounds = array<i64: 1, 32>}, {transform_indices = @transform_3, window_bounds = array<i64: 1, 32>}, {transform_indices = @transform_4, window_bounds = array<i64: 1, 16, 16, 32>}]} {
    %c0 = arith.constant 0 : index
    %c0_0 = arith.constant 0 : index
    %c0_1 = arith.constant 0 : index
    %c0_2 = arith.constant 0 : index
    %0 = vector.load %arg2[%c0, %c0_0, %c0_1, %c0_2] : memref<1x18x18x4xbf16, #tpu.memory_space<vmem>>, vector<1x18x18x4xbf16>
    %1 = vector.shape_cast %0 : vector<1x18x18x4xbf16> to vector<18x18x4xbf16>
    %cst = arith.constant 0.000000e+00 : f32
    %2 = vector.broadcast %cst : f32 to vector<256x32xf32>
    %3 = vector.extract_strided_slice %1 {offsets = [0, 0, 0], sizes = [16, 16, 4], strides = [1, 1, 1]} : vector<18x18x4xbf16> to vector<16x16x4xbf16>
    %4 = vector.shape_cast %3 : vector<16x16x4xbf16> to vector<256x4xbf16>
    %c0_3 = arith.constant 0 : index
    %c0_4 = arith.constant 0 : index
    %5 = vector.load %arg3[%c0_3, %c0_4] : memref<36x32xbf16, #tpu.memory_space<vmem>>, vector<4x32xbf16>
    %cst_5 = arith.constant dense<0.000000e+00> : vector<256x32xf32>
    %6 = tpu.matmul %4, %5, %cst_5 {dimension_numbers = #tpu.dot_dimension_numbers<[1], [0], [0], [1], [0, 0, 1, 1], [], []>} : vector<256x4xbf16>, vector<4x32xbf16>, vector<256x32xf32> -> vector<256x32xf32>
    %7 = arith.addf %2, %6 : vector<256x32xf32>
    %8 = vector.extract_strided_slice %1 {offsets = [0, 1, 0], sizes = [16, 16, 4], strides = [1, 1, 1]} : vector<18x18x4xbf16> to vector<16x16x4xbf16>
    %9 = vector.shape_cast %8 : vector<16x16x4xbf16> to vector<256x4xbf16>
    %c4 = arith.constant 4 : index
    %c0_6 = arith.constant 0 : index
    %10 = vector.load %arg3[%c4, %c0_6] : memref<36x32xbf16, #tpu.memory_space<vmem>>, vector<4x32xbf16>
    %cst_7 = arith.constant dense<0.000000e+00> : vector<256x32xf32>
    %11 = tpu.matmul %9, %10, %cst_7 {dimension_numbers = #tpu.dot_dimension_numbers<[1], [0], [0], [1], [0, 0, 1, 1], [], []>} : vector<256x4xbf16>, vector<4x32xbf16>, vector<256x32xf32> -> vector<256x32xf32>
    %12 = arith.addf %7, %11 : vector<256x32xf32>
    %13 = vector.extract_strided_slice %1 {offsets = [0, 2, 0], sizes = [16, 16, 4], strides = [1, 1, 1]} : vector<18x18x4xbf16> to vector<16x16x4xbf16>
    %14 = vector.shape_cast %13 : vector<16x16x4xbf16> to vector<256x4xbf16>
    %c8 = arith.constant 8 : index
    %c0_8 = arith.constant 0 : index
    %15 = vector.load %arg3[%c8, %c0_8] : memref<36x32xbf16, #tpu.memory_space<vmem>>, vector<4x32xbf16>
    %cst_9 = arith.constant dense<0.000000e+00> : vector<256x32xf32>
    %16 = tpu.matmul %14, %15, %cst_9 {dimension_numbers = #tpu.dot_dimension_numbers<[1], [0], [0], [1], [0, 0, 1, 1], [], []>} : vector<256x4xbf16>, vector<4x32xbf16>, vector<256x32xf32> -> vector<256x32xf32>
    %17 = arith.addf %12, %16 : vector<256x32xf32>
    %18 = vector.extract_strided_slice %1 {offsets = [1, 0, 0], sizes = [16, 16, 4], strides = [1, 1, 1]} : vector<18x18x4xbf16> to vector<16x16x4xbf16>
    %19 = vector.shape_cast %18 : vector<16x16x4xbf16> to vector<256x4xbf16>
    %c12 = arith.constant 12 : index
    %c0_10 = arith.constant 0 : index
    %20 = vector.load %arg3[%c12, %c0_10] : memref<36x32xbf16, #tpu.memory_space<vmem>>, vector<4x32xbf16>
    %cst_11 = arith.constant dense<0.000000e+00> : vector<256x32xf32>
    %21 = tpu.matmul %19, %20, %cst_11 {dimension_numbers = #tpu.dot_dimension_numbers<[1], [0], [0], [1], [0, 0, 1, 1], [], []>} : vector<256x4xbf16>, vector<4x32xbf16>, vector<256x32xf32> -> vector<256x32xf32>
    %22 = arith.addf %17, %21 : vector<256x32xf32>
    %23 = vector.extract_strided_slice %1 {offsets = [1, 1, 0], sizes = [16, 16, 4], strides = [1, 1, 1]} : vector<18x18x4xbf16> to vector<16x16x4xbf16>
    %24 = vector.shape_cast %23 : vector<16x16x4xbf16> to vector<256x4xbf16>
    %c16 = arith.constant 16 : index
    %c0_12 = arith.constant 0 : index
    %25 = vector.load %arg3[%c16, %c0_12] : memref<36x32xbf16, #tpu.memory_space<vmem>>, vector<4x32xbf16>
    %cst_13 = arith.constant dense<0.000000e+00> : vector<256x32xf32>
    %26 = tpu.matmul %24, %25, %cst_13 {dimension_numbers = #tpu.dot_dimension_numbers<[1], [0], [0], [1], [0, 0, 1, 1], [], []>} : vector<256x4xbf16>, vector<4x32xbf16>, vector<256x32xf32> -> vector<256x32xf32>
    %27 = arith.addf %22, %26 : vector<256x32xf32>
    %28 = vector.extract_strided_slice %1 {offsets = [1, 2, 0], sizes = [16, 16, 4], strides = [1, 1, 1]} : vector<18x18x4xbf16> to vector<16x16x4xbf16>
    %29 = vector.shape_cast %28 : vector<16x16x4xbf16> to vector<256x4xbf16>
    %c20 = arith.constant 20 : index
    %c0_14 = arith.constant 0 : index
    %30 = vector.load %arg3[%c20, %c0_14] : memref<36x32xbf16, #tpu.memory_space<vmem>>, vector<4x32xbf16>
    %cst_15 = arith.constant dense<0.000000e+00> : vector<256x32xf32>
    %31 = tpu.matmul %29, %30, %cst_15 {dimension_numbers = #tpu.dot_dimension_numbers<[1], [0], [0], [1], [0, 0, 1, 1], [], []>} : vector<256x4xbf16>, vector<4x32xbf16>, vector<256x32xf32> -> vector<256x32xf32>
    %32 = arith.addf %27, %31 : vector<256x32xf32>
    %33 = vector.extract_strided_slice %1 {offsets = [2, 0, 0], sizes = [16, 16, 4], strides = [1, 1, 1]} : vector<18x18x4xbf16> to vector<16x16x4xbf16>
    %34 = vector.shape_cast %33 : vector<16x16x4xbf16> to vector<256x4xbf16>
    %c24 = arith.constant 24 : index
    %c0_16 = arith.constant 0 : index
    %35 = vector.load %arg3[%c24, %c0_16] : memref<36x32xbf16, #tpu.memory_space<vmem>>, vector<4x32xbf16>
    %cst_17 = arith.constant dense<0.000000e+00> : vector<256x32xf32>
    %36 = tpu.matmul %34, %35, %cst_17 {dimension_numbers = #tpu.dot_dimension_numbers<[1], [0], [0], [1], [0, 0, 1, 1], [], []>} : vector<256x4xbf16>, vector<4x32xbf16>, vector<256x32xf32> -> vector<256x32xf32>
    %37 = arith.addf %32, %36 : vector<256x32xf32>
    %38 = vector.extract_strided_slice %1 {offsets = [2, 1, 0], sizes = [16, 16, 4], strides = [1, 1, 1]} : vector<18x18x4xbf16> to vector<16x16x4xbf16>
    %39 = vector.shape_cast %38 : vector<16x16x4xbf16> to vector<256x4xbf16>
    %c28 = arith.constant 28 : index
    %c0_18 = arith.constant 0 : index
    %40 = vector.load %arg3[%c28, %c0_18] : memref<36x32xbf16, #tpu.memory_space<vmem>>, vector<4x32xbf16>
    %cst_19 = arith.constant dense<0.000000e+00> : vector<256x32xf32>
    %41 = tpu.matmul %39, %40, %cst_19 {dimension_numbers = #tpu.dot_dimension_numbers<[1], [0], [0], [1], [0, 0, 1, 1], [], []>} : vector<256x4xbf16>, vector<4x32xbf16>, vector<256x32xf32> -> vector<256x32xf32>
    %42 = arith.addf %37, %41 : vector<256x32xf32>
    %43 = vector.extract_strided_slice %1 {offsets = [2, 2, 0], sizes = [16, 16, 4], strides = [1, 1, 1]} : vector<18x18x4xbf16> to vector<16x16x4xbf16>
    %44 = vector.shape_cast %43 : vector<16x16x4xbf16> to vector<256x4xbf16>
    %c32 = arith.constant 32 : index
    %c0_20 = arith.constant 0 : index
    %45 = vector.load %arg3[%c32, %c0_20] : memref<36x32xbf16, #tpu.memory_space<vmem>>, vector<4x32xbf16>
    %cst_21 = arith.constant dense<0.000000e+00> : vector<256x32xf32>
    %46 = tpu.matmul %44, %45, %cst_21 {dimension_numbers = #tpu.dot_dimension_numbers<[1], [0], [0], [1], [0, 0, 1, 1], [], []>} : vector<256x4xbf16>, vector<4x32xbf16>, vector<256x32xf32> -> vector<256x32xf32>
    %47 = arith.addf %42, %46 : vector<256x32xf32>
    %c0_22 = arith.constant 0 : index
    %c0_23 = arith.constant 0 : index
    %48 = vector.load %arg4[%c0_22, %c0_23] : memref<1x32xf32, #tpu.memory_space<vmem>>, vector<1x32xf32>
    %49 = vector.broadcast %48 : vector<1x32xf32> to vector<256x32xf32>
    %50 = arith.mulf %47, %49 : vector<256x32xf32>
    %c0_24 = arith.constant 0 : index
    %c0_25 = arith.constant 0 : index
    %51 = vector.load %arg5[%c0_24, %c0_25] : memref<1x32xf32, #tpu.memory_space<vmem>>, vector<1x32xf32>
    %52 = vector.broadcast %51 : vector<1x32xf32> to vector<256x32xf32>
    %53 = arith.addf %50, %52 : vector<256x32xf32>
    %cst_26 = arith.constant 0.000000e+00 : f32
    %54 = vector.broadcast %cst_26 : f32 to vector<256x32xf32>
    %55 = arith.maximumf %53, %54 : vector<256x32xf32>
    %56 = vector.shape_cast %55 : vector<256x32xf32> to vector<16x16x32xf32>
    %57 = arith.truncf %56 : vector<16x16x32xf32> to vector<16x16x32xbf16>
    %c0_27 = arith.constant 0 : index
    %c0_28 = arith.constant 0 : index
    %c0_29 = arith.constant 0 : index
    %c0_30 = arith.constant 0 : index
    %58 = vector.load %arg6[%c0_27, %c0_28, %c0_29, %c0_30] : memref<1x16x16x32xbf16, #tpu.memory_space<vmem>>, vector<1x16x16x32xbf16>
    %59 = vector.shape_cast %58 : vector<1x16x16x32xbf16> to vector<16x16x32xbf16>
    %60 = vector.shape_cast %57 : vector<16x16x32xbf16> to vector<1x16x16x32xbf16>
    tpu.vector_store %arg6[%c0_27, %c0_28, %c0_29, %c0_30], %60 {strides = array<i32>} : memref<1x16x16x32xbf16, #tpu.memory_space<vmem>>, vector<1x16x16x32xbf16>,
    return
  }
  func.func @transform_0(%arg0: i32, %arg1: i32) -> (i32, i32, i32, i32) {
    %c0_i32 = arith.constant 0 : i32
    %c0_i32_0 = arith.constant 0 : i32
    %c0_i32_1 = arith.constant 0 : i32
    %c0_i32_2 = arith.constant 0 : i32
    return %arg0, %c0_i32, %c0_i32_0, %c0_i32_1 : i32, i32, i32, i32
  }
  func.func @transform_1(%arg0: i32, %arg1: i32) -> (i32, i32) {
    %c0_i32 = arith.constant 0 : i32
    %c0_i32_0 = arith.constant 0 : i32
    return %c0_i32, %arg1 : i32, i32
  }
  func.func @transform_2(%arg0: i32, %arg1: i32) -> (i32, i32) {
    %c0_i32 = arith.constant 0 : i32
    %c0_i32_0 = arith.constant 0 : i32
    return %c0_i32, %arg1 : i32, i32
  }
  func.func @transform_3(%arg0: i32, %arg1: i32) -> (i32, i32) {
    %c0_i32 = arith.constant 0 : i32
    %c0_i32_0 = arith.constant 0 : i32
    return %c0_i32, %arg1 : i32, i32
  }
  func.func @transform_4(%arg0: i32, %arg1: i32) -> (i32, i32, i32, i32) {
    %c0_i32 = arith.constant 0 : i32
    %c0_i32_0 = arith.constant 0 : i32
    %c0_i32_1 = arith.constant 0 : i32
    return %arg0, %c0_i32, %c0_i32_0, %arg1 : i32, i32, i32, i32
  }
}

</mosaic_0001>

<llo_original>
// kernel: tpu_custom_call.1
$region0: #{tpu_custom_call.1}
  #allocation0 [shape = 'u32[]', space=smem, size = 0x4, offset = 0x4, fixed_abs, tag = 'smem constant byte address 0x4 - core index']
  #allocation1 [shape = 'u32[72,128]{1,0:T(1,128)}', space=vmem, size = 0x9000, scoped, tag = 'internal scratch']
  %s0 = inlined_call_operand.vmem [shape: bf16[2,18,18,4], index: 0, kind: input, shape index: {}]
  %s1 = inlined_call_operand.vmem [shape: bf16[36,32], index: 1, kind: input, shape index: {}]
  %s2 = inlined_call_operand.vmem [shape: f32[1,32], index: 2, kind: input, shape index: {}]
  %s3 = inlined_call_operand.vmem [shape: f32[1,32], index: 3, kind: input, shape index: {}]
  %s4 = inlined_call_operand.hbm [shape: bf16[2,16,16,32], index: 4, kind: output, shape index: {}]
  %s5 = sld [smem:[#allocation0]]
  $region49: #{tpu_custom_call.1} parent=0
    _
  %s7 = ssub.s32 1, %s5
  %s8 = scalar_select 0, %s7, %s5
  $region1: #{tpu_custom_call.1} parent=0
    #allocation2 [shape = 'u8[131072]{0}', space=vmem, size = 0x20000, scoped, tag = 'output window, operand 0']
    #allocation3 [shape = 's32[2]{0}', space=sflag, size = 0x8, scoped, tag = 'scoped memory for tpu_custom_call.1']
    %9 = vsyncpa [#allocation3], 0
    %s10 = scalar_lea.sflag [#allocation3], 1
    %11 = vsyncpa %s10, 0
    loop: start=0, step=1, limit=4
    $region2: #{tpu_custom_call.1} parent=1 // loop_pre_header
      _
    $region3: #{tpu_custom_call.1} parent=1 // loop_header
      %s13 = sphi 0, %s17
      %p14 = scmp.ge.s32.totalorder %s13, 4
      %s20 = sphi 0, %s32
      %s21 = sphi 0, %s28
      %s22 = sphi 0, %s20
      %s23 = sphi 0, %s21
      %s24 = sphi 0, %s22
      %s25 = sphi 0, %s23
      %s35 = sphi 0, %s37
      %s38 = sphi 0, %s35
      %s39 = sphi 0, %s38
      %s55 = sphi 0, %s39
      %s61 = sphi 0, %s63
      %s64 = sphi 0, %s61
      %s65 = sphi 0, %s64
      %s81 = sphi 0, %s65
      %s87 = sphi 0, %s89
      %s90 = sphi 0, %s87
      %s91 = sphi 0, %s90
      %s107 = sphi 0, %s91
      %s113 = sphi 0, %s115
      %s116 = sphi 0, %s113
      %s117 = sphi 0, %s116
      %s133 = sphi 0, %s117
      %s141 = sphi 0, %s143
      %s144 = sphi 0, %s141
      %s145 = sphi 0, %s144
      %s161 = sphi 0, %s145
    $region4: #{tpu_custom_call.1} parent=1 // loop_header_branch
      %16 = sbr.rel (%p14) target = $region8
    $region5: #{tpu_custom_call.1} parent=1 // loop_body
      %s18 = ssub.s32 %s13, 1
      %s19 = ssub.s32 %s13, 2
      %s26 = sadd.s32 1, %s21
      %p27 = scmp.ge.s32.totalorder %s26, 1
      %s28 = scalar_select %p27, 0, %s26
      %s29 = sadd.s32 1, %s20
      %s30 = scalar_select %p27, %s29, %s20
      %p31 = scmp.ge.s32.totalorder %s30, 2
      %s32 = scalar_select %p31, 0, %s30
      %s33 = ssub.s32 %s20, %s32
      %p34 = scmp.eq.s32.totalorder %s33, 0
      %s36 = sadd.s32 %s35, 1
      %s37 = scalar_select %p34, %s35, %s36
      %p40 = pneg %p34
      %p41 = scmp.eq.s32.totalorder %s13, 1
      %p42 = por %p40, %p41
      %p43 = scmp.ne.s32.totalorder %s35, %s38
      %p44 = scmp.eq.s32.totalorder %s13, 0
      %p45 = por %p43, %p44
      %p46 = scmp.ne.s32.totalorder %s35, %s38
      %p47 = scmp.eq.s32.totalorder %s18, 1
      %p48 = por %p46, %p47
      %p49 = scmp.ne.s32.totalorder %s38, %s39
      %p50 = scmp.eq.s32.totalorder %s18, 0
      %p51 = por %p49, %p50
      %p52 = scmp.ne.s32.totalorder %s38, %s39
      %p53 = scmp.eq.s32.totalorder %s19, 1
      %p54 = por %p52, %p53
      %p56 = scmp.ne.s32.totalorder %s39, %s55
      %p57 = scmp.eq.s32.totalorder %s19, 0
      %p58 = por %p56, %p57
      %s59 = ssub.s32 %s21, %s28
      %p60 = scmp.eq.s32.totalorder %s59, 0
      %s62 = sadd.s32 %s61, 1
      %s63 = scalar_select %p60, %s61, %s62
      %p66 = pneg %p60
      %p67 = scmp.eq.s32.totalorder %s13, 1
      %p68 = por %p66, %p67
      %p69 = scmp.ne.s32.totalorder %s61, %s64
      %p70 = scmp.eq.s32.totalorder %s13, 0
      %p71 = por %p69, %p70
      %p72 = scmp.ne.s32.totalorder %s61, %s64
      %p73 = scmp.eq.s32.totalorder %s18, 1
      %p74 = por %p72, %p73
      %p75 = scmp.ne.s32.totalorder %s64, %s65
      %p76 = scmp.eq.s32.totalorder %s18, 0
      %p77 = por %p75, %p76
      %p78 = scmp.ne.s32.totalorder %s64, %s65
      %p79 = scmp.eq.s32.totalorder %s19, 1
      %p80 = por %p78, %p79
      %p82 = scmp.ne.s32.totalorder %s65, %s81
      %p83 = scmp.eq.s32.totalorder %s19, 0
      %p84 = por %p82, %p83
      %s85 = ssub.s32 %s21, %s28
      %p86 = scmp.eq.s32.totalorder %s85, 0
      %s88 = sadd.s32 %s87, 1
      %s89 = scalar_select %p86, %s87, %s88
      %p92 = pneg %p86
      %p93 = scmp.eq.s32.totalorder %s13, 1
      %p94 = por %p92, %p93
      %p95 = scmp.ne.s32.totalorder %s87, %s90
      %p96 = scmp.eq.s32.totalorder %s13, 0
      %p97 = por %p95, %p96
      %p98 = scmp.ne.s32.totalorder %s87, %s90
      %p99 = scmp.eq.s32.totalorder %s18, 1
      %p100 = por %p98, %p99
      %p101 = scmp.ne.s32.totalorder %s90, %s91
      %p102 = scmp.eq.s32.totalorder %s18, 0
      %p103 = por %p101, %p102
      %p104 = scmp.ne.s32.totalorder %s90, %s91
      %p105 = scmp.eq.s32.totalorder %s19, 1
      %p106 = por %p104, %p105
      %p108 = scmp.ne.s32.totalorder %s91, %s107
      %p109 = scmp.eq.s32.totalorder %s19, 0
      %p110 = por %p108, %p109
      %s111 = ssub.s32 %s21, %s28
      %p112 = scmp.eq.s32.totalorder %s111, 0
      %s114 = sadd.s32 %s113, 1
      %s115 = scalar_select %p112, %s113, %s114
      %p118 = pneg %p112
      %p119 = scmp.eq.s32.totalorder %s13, 1
      %p120 = por %p118, %p119
      %p121 = scmp.ne.s32.totalorder %s113, %s116
      %p122 = scmp.eq.s32.totalorder %s13, 0
      %p123 = por %p121, %p122
      %p124 = scmp.ne.s32.totalorder %s113, %s116
      %p125 = scmp.eq.s32.totalorder %s18, 1
      %p126 = por %p124, %p125
      %p127 = scmp.ne.s32.totalorder %s116, %s117
      %p128 = scmp.eq.s32.totalorder %s18, 0
      %p129 = por %p127, %p128
      %p130 = scmp.ne.s32.totalorder %s116, %s117
      %p131 = scmp.eq.s32.totalorder %s19, 1
      %p132 = por %p130, %p131
      %p134 = scmp.ne.s32.totalorder %s117, %s133
      %p135 = scmp.eq.s32.totalorder %s19, 0
      %p136 = por %p134, %p135
      %s137 = ssub.s32 %s20, %s32
      %s138 = ssub.s32 %s21, %s28
      %s139 = sor.u32 %s137, %s138
      %p140 = scmp.eq.s32.totalorder %s139, 0
      %s142 = sadd.s32 %s141, 1
      %s143 = scalar_select %p140, %s141, %s142
      %p146 = pneg %p140
      %p147 = scmp.eq.s32.totalorder %s13, 1
      %p148 = por %p146, %p147
      %p149 = scmp.ne.s32.totalorder %s141, %s144
      %p150 = scmp.eq.s32.totalorder %s13, 0
      %p151 = por %p149, %p150
      %p152 = scmp.ne.s32.totalorder %s141, %s144
      %p153 = scmp.eq.s32.totalorder %s18, 1
      %p154 = por %p152, %p153
      %p155 = scmp.ne.s32.totalorder %s144, %s145
      %p156 = scmp.eq.s32.totalorder %s18, 0
      %p157 = por %p155, %p156
      %p158 = scmp.ne.s32.totalorder %s144, %s145
      %p159 = scmp.eq.s32.totalorder %s19, 1
      %p160 = por %p158, %p159
      %p162 = scmp.ne.s32.totalorder %s145, %s161
      %p163 = scmp.eq.s32.totalorder %s19, 0
      %p164 = por %p162, %p163
      %p165 = scmp.le.s32.totalorder 1, %s13
      %p166 = scmp.lt.s32.totalorder %s13, 3
      %p167 = pnand %p165, %p166
      %p168 = pneg %p167
      // Predicated region
      $region9: #{tpu_custom_call.1} parent=5 // pred_check
        _
      $region10: #{tpu_custom_call.1} parent=5 // pred_check_branch
        %170 = sbr.rel (%p167) target = $region12
      $region11: #{tpu_custom_call.1} parent=5 // pred_region
        %s171 = ssub.s32 %s13, 1
        // Predicated region
        $region13: #{tpu_custom_call.1} parent=11 // pred_check
          %p172 = pneg %p77
        $region14: #{tpu_custom_call.1} parent=11 // pred_check_branch
          %174 = sbr.rel (%p172) target = $region16
        $region15: #{tpu_custom_call.1} parent=11 // pred_region
          %p175 = scmp.lt.s32.totalorder %s23, 0
          %s176 = scalar_select %p175, %s23, 0
          %s177 = smul.addr %s176, 4
          %s178 = scalar_lea.vmem %s1, %s177
        $region16: #{tpu_custom_call.1} parent=11 // pred_fallthru
          _
        // Predicated region
        $region17: #{tpu_custom_call.1} parent=11 // pred_check
          %p179 = pneg %p103
        $region18: #{tpu_custom_call.1} parent=11 // pred_check_branch
          %181 = sbr.rel (%p179) target = $region20
        $region19: #{tpu_custom_call.1} parent=11 // pred_region
          %p182 = scmp.lt.s32.totalorder %s23, 0
          %s183 = scalar_select %p182, %s23, 0
          %s184 = scalar_lea.vmem %s2, %s183
        $region20: #{tpu_custom_call.1} parent=11 // pred_fallthru
          _
        // Predicated region
        $region21: #{tpu_custom_call.1} parent=11 // pred_check
          %p185 = pneg %p129
        $region22: #{tpu_custom_call.1} parent=11 // pred_check_branch
          %187 = sbr.rel (%p185) target = $region24
        $region23: #{tpu_custom_call.1} parent=11 // pred_region
          %p188 = scmp.lt.s32.totalorder %s23, 0
          %s189 = scalar_select %p188, %s23, 0
          %s190 = scalar_lea.vmem %s3, %s189
        $region24: #{tpu_custom_call.1} parent=11 // pred_fallthru
          _
      $region12: #{tpu_custom_call.1} parent=5 // pred_fallthru
        _
      %p191 = scmp.lt.s32.totalorder %s13, 2
      // Predicated region
      $region25: #{tpu_custom_call.1} parent=5 // pred_check
        %p192 = pneg %p191
      $region26: #{tpu_custom_call.1} parent=5 // pred_check_branch
        %194 = sbr.rel (%p192) target = $region28
      $region27: #{tpu_custom_call.1} parent=5 // pred_region
        // Predicated region
        $region29: #{tpu_custom_call.1} parent=27 // pred_check
          %p195 = pneg %p45
        $region30: #{tpu_custom_call.1} parent=27 // pred_check_branch
          %197 = sbr.rel (%p195) target = $region32
        $region31: #{tpu_custom_call.1} parent=27 // pred_region
          %p198 = scmp.lt.s32.totalorder %s20, 1
          %s199 = scalar_select %p198, %s20, 1
          %s200 = smul.addr %s199, 54
          %s201 = smul.addr %s200, 4
          %s202 = scalar_lea.vmem %s0, %s201
        $region32: #{tpu_custom_call.1} parent=27 // pred_fallthru
          _
      $region28: #{tpu_custom_call.1} parent=5 // pred_fallthru
        _
      %p203 = scmp.le.s32.totalorder 1, %s13
      %p204 = scmp.lt.s32.totalorder %s13, 3
      %p205 = pnand %p203, %p204
      %p206 = pneg %p205
      // Predicated region
      $region33: #{tpu_custom_call.1} parent=5 // pred_check
        _
      $region34: #{tpu_custom_call.1} parent=5 // pred_check_branch
        %208 = sbr.rel (%p205) target = $region36
      $region35: #{tpu_custom_call.1} parent=5 // pred_region
        %s209 = ssub.s32 %s13, 1
        %p210 = scmp.lt.s32.totalorder %s22, 1
        %s211 = scalar_select %p210, %s22, 1
        %s212 = smul.addr %s211, 54
        %s213 = smul.addr %s212, 4
        %s214 = scalar_lea.vmem %s0, %s213
        %p215 = pneg %p51
        %p216 = pneg %p48
        %p217 = scmp.lt.s32.totalorder %s23, 0
        %s218 = scalar_select %p217, %s23, 0
        %s219 = smul.addr %s218, 4
        %s220 = scalar_lea.vmem %s1, %s219
        %p221 = pneg %p77
        %p222 = pneg %p74
        %p223 = scmp.lt.s32.totalorder %s23, 0
        %s224 = scalar_select %p223, %s23, 0
        %s225 = scalar_lea.vmem %s2, %s224
        %p226 = pneg %p103
        %p227 = pneg %p100
        %p228 = scmp.lt.s32.totalorder %s23, 0
        %s229 = scalar_select %p228, %s23, 0
        %s230 = scalar_lea.vmem %s3, %s229
        %p231 = pneg %p129
        %p232 = pneg %p126
        %p233 = pneg %p157
        %p234 = pneg %p154
        %s235 = sand.u32 %s144, 1
        %s236 = scalar_lea.sflag [#allocation3], %s235
        %s237 = sand.u32 %s144, 1
        %s238 = smul.addr %s237, 128
        %s239 = scalar_lea.vmem [#allocation2], %s238
        %p240 = scmp.lt.s32.totalorder %s22, 1
        %s241 = scalar_select %p240, %s22, 1
        %s242 = smul.addr %s241, 54
        %s243 = smul.addr %s242, 4
        %s244 = scalar_lea.vmem %s0, %s243
        %p245 = scmp.lt.s32.totalorder %s23, 0
        %s246 = scalar_select %p245, %s23, 0
        %s247 = smul.addr %s246, 4
        %s248 = scalar_lea.vmem %s1, %s247
        %p249 = scmp.lt.s32.totalorder %s23, 0
        %s250 = scalar_select %p249, %s23, 0
        %s251 = scalar_lea.vmem %s2, %s250
        %p252 = scmp.lt.s32.totalorder %s23, 0
        %s253 = scalar_select %p252, %s23, 0
        %s254 = scalar_lea.vmem %s3, %s253
        %v256 = vld [vmem:[%s244] sm:$0xf]
        %v257 = vld [vmem:[%s244 + $0x4] sm:$0xf]
        %v258 = vld [vmem:[%s244 + $0x8] sm:$0x1]
        %v259 = vld [vmem:[%s244 + $0xc] sm:$0xf]
        %v260 = vld [vmem:[%s244 + $0x10] sm:$0xf]
        %v261 = vld [vmem:[%s244 + $0x14] sm:$0x1]
        %v262 = vld [vmem:[%s244 + $0x18] sm:$0xf]
        %v263 = vld [vmem:[%s244 + $0x1c] sm:$0xf]
        %v264 = vld [vmem:[%s244 + $0x20] sm:$0x1]
        %v265 = vld [vmem:[%s244 + $0x24] sm:$0xf]
        %v266 = vld [vmem:[%s244 + $0x28] sm:$0xf]
        %v267 = vld [vmem:[%s244 + $0x2c] sm:$0x1]
        %v268 = vld [vmem:[%s244 + $0x30] sm:$0xf]
        %v269 = vld [vmem:[%s244 + $0x34] sm:$0xf]
        %v270 = vld [vmem:[%s244 + $0x38] sm:$0x1]
        %v271 = vld [vmem:[%s244 + $0x3c] sm:$0xf]
        %v272 = vld [vmem:[%s244 + $0x40] sm:$0xf]
        %v273 = vld [vmem:[%s244 + $0x44] sm:$0x1]
        %v274 = vld [vmem:[%s244 + $0x48] sm:$0xf]
        %v275 = vld [vmem:[%s244 + $0x4c] sm:$0xf]
        %v276 = vld [vmem:[%s244 + $0x50] sm:$0x1]
        %v277 = vld [vmem:[%s244 + $0x54] sm:$0xf]
        %v278 = vld [vmem:[%s244 + $0x58] sm:$0xf]
        %v279 = vld [vmem:[%s244 + $0x5c] sm:$0x1]
        %v280 = vld [vmem:[%s244 + $0x60] sm:$0xf]
        %v281 = vld [vmem:[%s244 + $0x64] sm:$0xf]
        %v282 = vld [vmem:[%s244 + $0x68] sm:$0x1]
        %v283 = vld [vmem:[%s244 + $0x6c] sm:$0xf]
        %v284 = vld [vmem:[%s244 + $0x70] sm:$0xf]
        %v285 = vld [vmem:[%s244 + $0x74] sm:$0x1]
        %v286 = vld [vmem:[%s244 + $0x78] sm:$0xf]
        %v287 = vld [vmem:[%s244 + $0x7c] sm:$0xf]
        %v288 = vld [vmem:[%s244 + $0x80] sm:$0x1]
        %v289 = vld [vmem:[%s244 + $0x84] sm:$0xf]
        %v290 = vld [vmem:[%s244 + $0x88] sm:$0xf]
        %v291 = vld [vmem:[%s244 + $0x8c] sm:$0x1]
        %v292 = vld [vmem:[%s244 + $0x90] sm:$0xf]
        %v293 = vld [vmem:[%s244 + $0x94] sm:$0xf]
        %v294 = vld [vmem:[%s244 + $0x98] sm:$0x1]
        %v295 = vld [vmem:[%s244 + $0x9c] sm:$0xf]
        %v296 = vld [vmem:[%s244 + $0xa0] sm:$0xf]
        %v297 = vld [vmem:[%s244 + $0xa4] sm:$0x1]
        %v298 = vld [vmem:[%s244 + $0xa8] sm:$0xf]
        %v299 = vld [vmem:[%s244 + $0xac] sm:$0xf]
        %v300 = vld [vmem:[%s244 + $0xb0] sm:$0x1]
        %v301 = vld [vmem:[%s244 + $0xb4] sm:$0xf]
        %v302 = vld [vmem:[%s244 + $0xb8] sm:$0xf]
        %v303 = vld [vmem:[%s244 + $0xbc] sm:$0x1]
        %v304 = vld [vmem:[%s244 + $0xc0] sm:$0xf]
        %v305 = vld [vmem:[%s244 + $0xc4] sm:$0xf]
        %v306 = vld [vmem:[%s244 + $0xc8] sm:$0x1]
        %v307 = vld [vmem:[%s244 + $0xcc] sm:$0xf]
        %v308 = vld [vmem:[%s244 + $0xd0] sm:$0xf]
        %v309 = vld [vmem:[%s244 + $0xd4] sm:$0x1]
        %v310 = vld [vmem:[%s248] sm:$0x3]
        %vm311 = vsmask.f32 3328
        %vm312 = vsmask.f32 7440
        %vm313 = vmor %vm311, %vm312
        %v315 = vshrl.u32 %v256, 16
        %v317 = vrot.slane %v315, 4
        %v318 = vshll.u32 %v256, 16
        %v320 = vrot.slane %v318, 5
        %v321 = vor.u32 %v317, %v320
        %v322 = vrot.slane %v321, 4
        %v324 = vshll.u32 %v257, 16
        %v326 = vrot.slane %v324, 5
        %v327 = vsel %vm313, %v322, %v326
        %v328 = vshrl.u32 %v257, 16
        %v330 = vrot.slane %v328, 4
        %v331 = vor.u32 %v330, %v326
        %v332 = vrot.slane %v331, 4
        %v334 = vshll.u32 %v258, 16
        %v336 = vrot.slane %v334, 5
        %v337 = vsel %vm313, %v332, %v336
        %v339 = vshrl.u32 %v259, 16
        %v341 = vrot.slane %v339, 4
        %v342 = vshll.u32 %v259, 16
        %v344 = vrot.slane %v342, 5
        %v345 = vor.u32 %v341, %v344
        %v346 = vrot.slane %v345, 4
        %v348 = vshll.u32 %v260, 16
        %v350 = vrot.slane %v348, 5
        %v351 = vsel %vm313, %v346, %v350
        %v352 = vshrl.u32 %v260, 16
        %v354 = vrot.slane %v352, 4
        %v355 = vor.u32 %v354, %v350
        %v356 = vrot.slane %v355, 4
        %v358 = vshll.u32 %v261, 16
        %v360 = vrot.slane %v358, 5
        %v361 = vsel %vm313, %v356, %v360
        %v363 = vshrl.u32 %v262, 16
        %v365 = vrot.slane %v363, 4
        %v366 = vshll.u32 %v262, 16
        %v368 = vrot.slane %v366, 5
        %v369 = vor.u32 %v365, %v368
        %v370 = vrot.slane %v369, 4
        %v372 = vshll.u32 %v263, 16
        %v374 = vrot.slane %v372, 5
        %v375 = vsel %vm313, %v370, %v374
        %v376 = vshrl.u32 %v263, 16
        %v378 = vrot.slane %v376, 4
        %v379 = vor.u32 %v378, %v374
        %v380 = vrot.slane %v379, 4
        %v382 = vshll.u32 %v264, 16
        %v384 = vrot.slane %v382, 5
        %v385 = vsel %vm313, %v380, %v384
        %v387 = vshrl.u32 %v265, 16
        %v389 = vrot.slane %v387, 4
        %v390 = vshll.u32 %v265, 16
        %v392 = vrot.slane %v390, 5
        %v393 = vor.u32 %v389, %v392
        %v394 = vrot.slane %v393, 4
        %v396 = vshll.u32 %v266, 16
        %v398 = vrot.slane %v396, 5
        %v399 = vsel %vm313, %v394, %v398
        %v400 = vshrl.u32 %v266, 16
        %v402 = vrot.slane %v400, 4
        %v403 = vor.u32 %v402, %v398
        %v404 = vrot.slane %v403, 4
        %v406 = vshll.u32 %v267, 16
        %v408 = vrot.slane %v406, 5
        %v409 = vsel %vm313, %v404, %v408
        %v411 = vshrl.u32 %v268, 16
        %v413 = vrot.slane %v411, 4
        %v414 = vshll.u32 %v268, 16
        %v416 = vrot.slane %v414, 5
        %v417 = vor.u32 %v413, %v416
        %v418 = vrot.slane %v417, 4
        %v420 = vshll.u32 %v269, 16
        %v422 = vrot.slane %v420, 5
        %v423 = vsel %vm313, %v418, %v422
        %v424 = vshrl.u32 %v269, 16
        %v426 = vrot.slane %v424, 4
        %v427 = vor.u32 %v426, %v422
        %v428 = vrot.slane %v427, 4
        %v430 = vshll.u32 %v270, 16
        %v432 = vrot.slane %v430, 5
        %v433 = vsel %vm313, %v428, %v432
        %v435 = vshrl.u32 %v271, 16
        %v437 = vrot.slane %v435, 4
        %v438 = vshll.u32 %v271, 16
        %v440 = vrot.slane %v438, 5
        %v441 = vor.u32 %v437, %v440
        %v442 = vrot.slane %v441, 4
        %v444 = vshll.u32 %v272, 16
        %v446 = vrot.slane %v444, 5
        %v447 = vsel %vm313, %v442, %v446
        %v448 = vshrl.u32 %v272, 16
        %v450 = vrot.slane %v448, 4
        %v451 = vor.u32 %v450, %v446
        %v452 = vrot.slane %v451, 4
        %v454 = vshll.u32 %v273, 16
        %v456 = vrot.slane %v454, 5
        %v457 = vsel %vm313, %v452, %v456
        %v459 = vshrl.u32 %v274, 16
        %v461 = vrot.slane %v459, 4
        %v462 = vshll.u32 %v274, 16
        %v464 = vrot.slane %v462, 5
        %v465 = vor.u32 %v461, %v464
        %v466 = vrot.slane %v465, 4
        %v468 = vshll.u32 %v275, 16
        %v470 = vrot.slane %v468, 5
        %v471 = vsel %vm313, %v466, %v470
        %v472 = vshrl.u32 %v275, 16
        %v474 = vrot.slane %v472, 4
        %v475 = vor.u32 %v474, %v470
        %v476 = vrot.slane %v475, 4
        %v478 = vshll.u32 %v276, 16
        %v480 = vrot.slane %v478, 5
        %v481 = vsel %vm313, %v476, %v480
        %v483 = vshrl.u32 %v277, 16
        %v485 = vrot.slane %v483, 4
        %v486 = vshll.u32 %v277, 16
        %v488 = vrot.slane %v486, 5
        %v489 = vor.u32 %v485, %v488
        %v490 = vrot.slane %v489, 4
        %v492 = vshll.u32 %v278, 16
        %v494 = vrot.slane %v492, 5
        %v495 = vsel %vm313, %v490, %v494
        %v496 = vshrl.u32 %v278, 16
        %v498 = vrot.slane %v496, 4
        %v499 = vor.u32 %v498, %v494
        %v500 = vrot.slane %v499, 4
        %v502 = vshll.u32 %v279, 16
        %v504 = vrot.slane %v502, 5
        %v505 = vsel %vm313, %v500, %v504
        %v507 = vshrl.u32 %v280, 16
        %v509 = vrot.slane %v507, 4
        %v510 = vshll.u32 %v280, 16
        %v512 = vrot.slane %v510, 5
        %v513 = vor.u32 %v509, %v512
        %v514 = vrot.slane %v513, 4
        %v516 = vshll.u32 %v281, 16
        %v518 = vrot.slane %v516, 5
        %v519 = vsel %vm313, %v514, %v518
        %v520 = vshrl.u32 %v281, 16
        %v522 = vrot.slane %v520, 4
        %v523 = vor.u32 %v522, %v518
        %v524 = vrot.slane %v523, 4
        %v526 = vshll.u32 %v282, 16
        %v528 = vrot.slane %v526, 5
        %v529 = vsel %vm313, %v524, %v528
        %v531 = vshrl.u32 %v283, 16
        %v533 = vrot.slane %v531, 4
        %v534 = vshll.u32 %v283, 16
        %v536 = vrot.slane %v534, 5
        %v537 = vor.u32 %v533, %v536
        %v538 = vrot.slane %v537, 4
        %v540 = vshll.u32 %v284, 16
        %v542 = vrot.slane %v540, 5
        %v543 = vsel %vm313, %v538, %v542
        %v544 = vshrl.u32 %v284, 16
        %v546 = vrot.slane %v544, 4
        %v547 = vor.u32 %v546, %v542
        %v548 = vrot.slane %v547, 4
        %v550 = vshll.u32 %v285, 16
        %v552 = vrot.slane %v550, 5
        %v553 = vsel %vm313, %v548, %v552
        %v555 = vshrl.u32 %v286, 16
        %v557 = vrot.slane %v555, 4
        %v558 = vshll.u32 %v286, 16
        %v560 = vrot.slane %v558, 5
        %v561 = vor.u32 %v557, %v560
        %v562 = vrot.slane %v561, 4
        %v564 = vshll.u32 %v287, 16
        %v566 = vrot.slane %v564, 5
        %v567 = vsel %vm313, %v562, %v566
        %v568 = vshrl.u32 %v287, 16
        %v570 = vrot.slane %v568, 4
        %v571 = vor.u32 %v570, %v566
        %v572 = vrot.slane %v571, 4
        %v574 = vshll.u32 %v288, 16
        %v576 = vrot.slane %v574, 5
        %v577 = vsel %vm313, %v572, %v576
        %v579 = vshrl.u32 %v289, 16
        %v581 = vrot.slane %v579, 4
        %v582 = vshll.u32 %v289, 16
        %v584 = vrot.slane %v582, 5
        %v585 = vor.u32 %v581, %v584
        %v586 = vrot.slane %v585, 4
        %v588 = vshll.u32 %v290, 16
        %v590 = vrot.slane %v588, 5
        %v591 = vsel %vm313, %v586, %v590
        %v592 = vshrl.u32 %v290, 16
        %v594 = vrot.slane %v592, 4
        %v595 = vor.u32 %v594, %v590
        %v596 = vrot.slane %v595, 4
        %v598 = vshll.u32 %v291, 16
        %v600 = vrot.slane %v598, 5
        %v601 = vsel %vm313, %v596, %v600
        %v603 = vshrl.u32 %v292, 16
        %v605 = vrot.slane %v603, 4
        %v606 = vshll.u32 %v292, 16
        %v608 = vrot.slane %v606, 5
        %v609 = vor.u32 %v605, %v608
        %v610 = vrot.slane %v609, 4
        %v612 = vshll.u32 %v293, 16
        %v614 = vrot.slane %v612, 5
        %v615 = vsel %vm313, %v610, %v614
        %v616 = vshrl.u32 %v293, 16
        %v618 = vrot.slane %v616, 4
        %v619 = vor.u32 %v618, %v614
        %v620 = vrot.slane %v619, 4
        %v622 = vshll.u32 %v294, 16
        %v624 = vrot.slane %v622, 5
        %v625 = vsel %vm313, %v620, %v624
        %v627 = vshrl.u32 %v295, 16
        %v629 = vrot.slane %v627, 4
        %v630 = vshll.u32 %v295, 16
        %v632 = vrot.slane %v630, 5
        %v633 = vor.u32 %v629, %v632
        %v634 = vrot.slane %v633, 4
        %v636 = vshll.u32 %v296, 16
        %v638 = vrot.slane %v636, 5
        %v639 = vsel %vm313, %v634, %v638
        %v640 = vshrl.u32 %v296, 16
        %v642 = vrot.slane %v640, 4
        %v643 = vor.u32 %v642, %v638
        %v644 = vrot.slane %v643, 4
        %v646 = vshll.u32 %v297, 16
        %v648 = vrot.slane %v646, 5
        %v649 = vsel %vm313, %v644, %v648
        %v651 = vshrl.u32 %v298, 16
        %v653 = vrot.slane %v651, 4
        %v654 = vshll.u32 %v298, 16
        %v656 = vrot.slane %v654, 5
        %v657 = vor.u32 %v653, %v656
        %v658 = vrot.slane %v657, 4
        %v660 = vshll.u32 %v299, 16
        %v662 = vrot.slane %v660, 5
        %v663 = vsel %vm313, %v658, %v662
        %v664 = vshrl.u32 %v299, 16
        %v666 = vrot.slane %v664, 4
        %v667 = vor.u32 %v666, %v662
        %v668 = vrot.slane %v667, 4
        %v670 = vshll.u32 %v300, 16
        %v672 = vrot.slane %v670, 5
        %v673 = vsel %vm313, %v668, %v672
        %v675 = vshrl.u32 %v301, 16
        %v677 = vrot.slane %v675, 4
        %v678 = vshll.u32 %v301, 16
        %v680 = vrot.slane %v678, 5
        %v681 = vor.u32 %v677, %v680
        %v682 = vrot.slane %v681, 4
        %v684 = vshll.u32 %v302, 16
        %v686 = vrot.slane %v684, 5
        %v687 = vsel %vm313, %v682, %v686
        %v688 = vshrl.u32 %v302, 16
        %v690 = vrot.slane %v688, 4
        %v691 = vor.u32 %v690, %v686
        %v692 = vrot.slane %v691, 4
        %v694 = vshll.u32 %v303, 16
        %v696 = vrot.slane %v694, 5
        %v697 = vsel %vm313, %v692, %v696
        %v698 = vld [vmem:[%s248] sm:$0xc]
        %v699 = vunpack.c.l.b16 %v327
        %v700 = vunpack.c.l.b16 %v337
        %v701 = vunpack.c.l.b16 %v351
        %v702 = vunpack.c.l.b16 %v361
        %v703 = vunpack.c.l.b16 %v375
        %v704 = vunpack.c.l.b16 %v385
        %v705 = vunpack.c.l.b16 %v399
        %v706 = vunpack.c.l.b16 %v409
        %v707 = vunpack.c.l.b16 %v423
        %v708 = vunpack.c.l.b16 %v433
        %v709 = vunpack.c.l.b16 %v447
        %v710 = vunpack.c.l.b16 %v457
        %v711 = vunpack.c.l.b16 %v471
        %v712 = vunpack.c.l.b16 %v481
        %v713 = vunpack.c.l.b16 %v495
        %v714 = vunpack.c.l.b16 %v505
        %v715 = vunpack.c.l.b16 %v519
        %v716 = vunpack.c.l.b16 %v529
        %v717 = vunpack.c.l.b16 %v543
        %v718 = vunpack.c.l.b16 %v553
        %v719 = vunpack.c.l.b16 %v567
        %v720 = vunpack.c.l.b16 %v577
        %v721 = vunpack.c.l.b16 %v591
        %v722 = vunpack.c.l.b16 %v601
        %v723 = vunpack.c.l.b16 %v615
        %v724 = vunpack.c.l.b16 %v625
        %v725 = vunpack.c.l.b16 %v639
        %v726 = vunpack.c.l.b16 %v649
        %v727 = vunpack.c.l.b16 %v663
        %v728 = vunpack.c.l.b16 %v673
        %v729 = vunpack.c.l.b16 %v687
        %v730 = vunpack.c.l.b16 %v697
        %v731 = vpack.c.b16 %v700, %v699
        %v732 = vpack.c.b16 %v702, %v701
        %v733 = vpack.c.b16 %v704, %v703
        %v734 = vpack.c.b16 %v706, %v705
        %v735 = vpack.c.b16 %v708, %v707
        %v736 = vpack.c.b16 %v710, %v709
        %v737 = vpack.c.b16 %v712, %v711
        %v738 = vpack.c.b16 %v714, %v713
        %v739 = vpack.c.b16 %v716, %v715
        %v740 = vpack.c.b16 %v718, %v717
        %v741 = vpack.c.b16 %v720, %v719
        %v742 = vpack.c.b16 %v722, %v721
        %v743 = vpack.c.b16 %v724, %v723
        %v744 = vpack.c.b16 %v726, %v725
        %v745 = vpack.c.b16 %v728, %v727
        %v746 = vpack.c.b16 %v730, %v729
        %v748 = vunpack.c.l.b16 %v698
        %v749 = vpack.c.b16 %v748, %v748
        %v750 = vrot.slane %v749, 2
        %vm751 = vcmask 31744
        %v753 = vsel %vm751, %v731, 0
        %v756 = vsel %vm751, %v732, 0
        %v759 = vsel %vm751, %v733, 0
        %v762 = vsel %vm751, %v734, 0
        %v765 = vsel %vm751, %v735, 0
        %v768 = vsel %vm751, %v736, 0
        %v771 = vsel %vm751, %v737, 0
        %v774 = vsel %vm751, %v738, 0
        %v777 = vsel %vm751, %v739, 0
        %v780 = vsel %vm751, %v740, 0
        %v783 = vsel %vm751, %v741, 0
        %v786 = vsel %vm751, %v742, 0
        %v789 = vsel %vm751, %v743, 0
        %v792 = vsel %vm751, %v744, 0
        %v795 = vsel %vm751, %v745, 0
        %v798 = vsel %vm751, %v746, 0
        %vm800 = vcmask 1041408
        %v802 = vsel %vm800, %v750, 0
        %804 = vmatpush.bf16.msra.mxu0 0
        %805 = vmatpush.bf16.msra.mxu0 0
        %806 = vmatpush.bf16.msra.mxu0 0
        %807 = vmatpush.bf16.msra.mxu0 0
        %808 = vmatpush.bf16.msra.mxu0 0
        %809 = vmatpush.bf16.msra.mxu0 0
        %810 = vmatpush.bf16.msra.mxu0 0
        %811 = vmatpush.bf16.msra.mxu0 %v802
        %812 = vmatmul.bf16.gmra.mxu0 %v753
        %v813 = vpop.f32.mrf.mxu0
        %v814 = vadd.f32 0.0, %v813
        %v815 = vpop.f32.mrf.mxu0
        %v816 = vadd.f32 0.0, %v815
        %817 = vmatmul.bf16.gmra.mxu0 %v756
        %v818 = vpop.f32.mrf.mxu0
        %v819 = vadd.f32 0.0, %v818
        %v820 = vpop.f32.mrf.mxu0
        %v821 = vadd.f32 0.0, %v820
        %822 = vmatmul.bf16.gmra.mxu0 %v759
        %v823 = vpop.f32.mrf.mxu0
        %v824 = vadd.f32 0.0, %v823
        %v825 = vpop.f32.mrf.mxu0
        %v826 = vadd.f32 0.0, %v825
        %827 = vmatmul.bf16.gmra.mxu0 %v762
        %v828 = vpop.f32.mrf.mxu0
        %v829 = vadd.f32 0.0, %v828
        %v830 = vpop.f32.mrf.mxu0
        %v831 = vadd.f32 0.0, %v830
        %832 = vmatmul.bf16.gmra.mxu0 %v765
        %v833 = vpop.f32.mrf.mxu0
        %v834 = vadd.f32 0.0, %v833
        %v835 = vpop.f32.mrf.mxu0
        %v836 = vadd.f32 0.0, %v835
        %837 = vmatmul.bf16.gmra.mxu0 %v768
        %v838 = vpop.f32.mrf.mxu0
        %v839 = vadd.f32 0.0, %v838
        %v840 = vpop.f32.mrf.mxu0
        %v841 = vadd.f32 0.0, %v840
        %842 = vmatmul.bf16.gmra.mxu0 %v771
        %v843 = vpop.f32.mrf.mxu0
        %v844 = vadd.f32 0.0, %v843
        %v845 = vpop.f32.mrf.mxu0
        %v846 = vadd.f32 0.0, %v845
        %847 = vmatmul.bf16.gmra.mxu0 %v774
        %v848 = vpop.f32.mrf.mxu0
        %v849 = vadd.f32 0.0, %v848
        %v850 = vpop.f32.mrf.mxu0
        %v851 = vadd.f32 0.0, %v850
        %852 = vmatmul.bf16.gmra.mxu0 %v777
        %v853 = vpop.f32.mrf.mxu0
        %v854 = vadd.f32 0.0, %v853
        %v855 = vpop.f32.mrf.mxu0
        %v856 = vadd.f32 0.0, %v855
        %857 = vmatmul.bf16.gmra.mxu0 %v780
        %v858 = vpop.f32.mrf.mxu0
        %v859 = vadd.f32 0.0, %v858
        %v860 = vpop.f32.mrf.mxu0
        %v861 = vadd.f32 0.0, %v860
        %862 = vmatmul.bf16.gmra.mxu0 %v783
        %v863 = vpop.f32.mrf.mxu0
        %v864 = vadd.f32 0.0, %v863
        %v865 = vpop.f32.mrf.mxu0
        %v866 = vadd.f32 0.0, %v865
        %867 = vmatmul.bf16.gmra.mxu0 %v786
        %v868 = vpop.f32.mrf.mxu0
        %v869 = vadd.f32 0.0, %v868
        %v870 = vpop.f32.mrf.mxu0
        %v871 = vadd.f32 0.0, %v870
        %872 = vmatmul.bf16.gmra.mxu0 %v789
        %v873 = vpop.f32.mrf.mxu0
        %v874 = vadd.f32 0.0, %v873
        %v875 = vpop.f32.mrf.mxu0
        %v876 = vadd.f32 0.0, %v875
        %877 = vmatmul.bf16.gmra.mxu0 %v792
        %v878 = vpop.f32.mrf.mxu0
        %v879 = vadd.f32 0.0, %v878
        %v880 = vpop.f32.mrf.mxu0
        %v881 = vadd.f32 0.0, %v880
        %882 = vmatmul.bf16.gmra.mxu0 %v795
        %v883 = vpop.f32.mrf.mxu0
        %v884 = vadd.f32 0.0, %v883
        %v885 = vpop.f32.mrf.mxu0
        %v886 = vadd.f32 0.0, %v885
        %887 = vmatmul.bf16.gmra.mxu0 %v798
        %v888 = vpop.f32.mrf.mxu0
        %v889 = vadd.f32 0.0, %v888
        %v890 = vpop.f32.mrf.mxu0
        %v891 = vadd.f32 0.0, %v890
        %892 = vdwg.mxu0
        %v925 = vunpack.c.l.b16 %v256
        %v926 = vunpack.c.l.b16 %v257
        %v927 = vunpack.c.l.b16 %v259
        %v928 = vunpack.c.l.b16 %v260
        %v929 = vunpack.c.l.b16 %v262
        %v930 = vunpack.c.l.b16 %v263
        %v931 = vunpack.c.l.b16 %v265
        %v932 = vunpack.c.l.b16 %v266
        %v933 = vunpack.c.l.b16 %v268
        %v934 = vunpack.c.l.b16 %v269
        %v935 = vunpack.c.l.b16 %v271
        %v936 = vunpack.c.l.b16 %v272
        %v937 = vunpack.c.l.b16 %v274
        %v938 = vunpack.c.l.b16 %v275
        %v939 = vunpack.c.l.b16 %v277
        %v940 = vunpack.c.l.b16 %v278
        %v941 = vunpack.c.l.b16 %v280
        %v942 = vunpack.c.l.b16 %v281
        %v943 = vunpack.c.l.b16 %v283
        %v944 = vunpack.c.l.b16 %v284
        %v945 = vunpack.c.l.b16 %v286
        %v946 = vunpack.c.l.b16 %v287
        %v947 = vunpack.c.l.b16 %v289
        %v948 = vunpack.c.l.b16 %v290
        %v949 = vunpack.c.l.b16 %v292
        %v950 = vunpack.c.l.b16 %v293
        %v951 = vunpack.c.l.b16 %v295
        %v952 = vunpack.c.l.b16 %v296
        %v953 = vunpack.c.l.b16 %v298
        %v954 = vunpack.c.l.b16 %v299
        %v955 = vunpack.c.l.b16 %v301
        %v956 = vunpack.c.l.b16 %v302
        %v957 = vpack.c.b16 %v926, %v925
        %v958 = vpack.c.b16 %v928, %v927
        %v959 = vpack.c.b16 %v930, %v929
        %v960 = vpack.c.b16 %v932, %v931
        %v961 = vpack.c.b16 %v934, %v933
        %v962 = vpack.c.b16 %v936, %v935
        %v963 = vpack.c.b16 %v938, %v937
        %v964 = vpack.c.b16 %v940, %v939
        %v965 = vpack.c.b16 %v942, %v941
        %v966 = vpack.c.b16 %v944, %v943
        %v967 = vpack.c.b16 %v946, %v945
        %v968 = vpack.c.b16 %v948, %v947
        %v969 = vpack.c.b16 %v950, %v949
        %v970 = vpack.c.b16 %v952, %v951
        %v971 = vpack.c.b16 %v954, %v953
        %v972 = vpack.c.b16 %v956, %v955
        %v974 = vsel %vm751, %v957, 0
        %v977 = vsel %vm751, %v958, 0
        %v980 = vsel %vm751, %v959, 0
        %v983 = vsel %vm751, %v960, 0
        %v986 = vsel %vm751, %v961, 0
        %v989 = vsel %vm751, %v962, 0
        %v992 = vsel %vm751, %v963, 0
        %v995 = vsel %vm751, %v964, 0
        %v998 = vsel %vm751, %v965, 0
        %v1001 = vsel %vm751, %v966, 0
        %v1004 = vsel %vm751, %v967, 0
        %v1007 = vsel %vm751, %v968, 0
        %v1010 = vsel %vm751, %v969, 0
        %v1013 = vsel %vm751, %v970, 0
        %v1016 = vsel %vm751, %v971, 0
        %v1019 = vsel %vm751, %v972, 0
        %v1022 = vsel %vm800, %v310, 0
        %1024 = vmatpush.bf16.msra.mxu0 0
        %1025 = vmatpush.bf16.msra.mxu0 0
        %1026 = vmatpush.bf16.msra.mxu0 0
        %1027 = vmatpush.bf16.msra.mxu0 0
        %1028 = vmatpush.bf16.msra.mxu0 0
        %1029 = vmatpush.bf16.msra.mxu0 0
        %1030 = vmatpush.bf16.msra.mxu0 0
        %1031 = vmatpush.bf16.msra.mxu0 %v1022
        %1032 = vmatmul.bf16.gmra.mxu0 %v974
        %v1033 = vpop.f32.mrf.mxu0
        %v1034 = vadd.f32 %v814, %v1033
        %v1035 = vpop.f32.mrf.mxu0
        %v1036 = vadd.f32 %v816, %v1035
        %1037 = vmatmul.bf16.gmra.mxu0 %v977
        %v1038 = vpop.f32.mrf.mxu0
        %v1039 = vadd.f32 %v819, %v1038
        %v1040 = vpop.f32.mrf.mxu0
        %v1041 = vadd.f32 %v821, %v1040
        %1042 = vmatmul.bf16.gmra.mxu0 %v980
        %v1043 = vpop.f32.mrf.mxu0
        %v1044 = vadd.f32 %v824, %v1043
        %v1045 = vpop.f32.mrf.mxu0
        %v1046 = vadd.f32 %v826, %v1045
        %1047 = vmatmul.bf16.gmra.mxu0 %v983
        %v1048 = vpop.f32.mrf.mxu0
        %v1049 = vadd.f32 %v829, %v1048
        %v1050 = vpop.f32.mrf.mxu0
        %v1051 = vadd.f32 %v831, %v1050
        %1052 = vmatmul.bf16.gmra.mxu0 %v986
        %v1053 = vpop.f32.mrf.mxu0
        %v1054 = vadd.f32 %v834, %v1053
        %v1055 = vpop.f32.mrf.mxu0
        %v1056 = vadd.f32 %v836, %v1055
        %1057 = vmatmul.bf16.gmra.mxu0 %v989
        %v1058 = vpop.f32.mrf.mxu0
        %v1059 = vadd.f32 %v839, %v1058
        %v1060 = vpop.f32.mrf.mxu0
        %v1061 = vadd.f32 %v841, %v1060
        %1062 = vmatmul.bf16.gmra.mxu0 %v992
        %v1063 = vpop.f32.mrf.mxu0
        %v1064 = vadd.f32 %v844, %v1063
        %v1065 = vpop.f32.mrf.mxu0
        %v1066 = vadd.f32 %v846, %v1065
        %1067 = vmatmul.bf16.gmra.mxu0 %v995
        %v1068 = vpop.f32.mrf.mxu0
        %v1069 = vadd.f32 %v849, %v1068
        %v1070 = vpop.f32.mrf.mxu0
        %v1071 = vadd.f32 %v851, %v1070
        %1072 = vmatmul.bf16.gmra.mxu0 %v998
        %v1073 = vpop.f32.mrf.mxu0
        %v1074 = vadd.f32 %v854, %v1073
        %v1075 = vpop.f32.mrf.mxu0
        %v1076 = vadd.f32 %v856, %v1075
        %1077 = vmatmul.bf16.gmra.mxu0 %v1001
        %v1078 = vpop.f32.mrf.mxu0
        %v1079 = vadd.f32 %v859, %v1078
        %v1080 = vpop.f32.mrf.mxu0
        %v1081 = vadd.f32 %v861, %v1080
        %1082 = vmatmul.bf16.gmra.mxu0 %v1004
        %v1083 = vpop.f32.mrf.mxu0
        %v1084 = vadd.f32 %v864, %v1083
        %v1085 = vpop.f32.mrf.mxu0
        %v1086 = vadd.f32 %v866, %v1085
        %1087 = vmatmul.bf16.gmra.mxu0 %v1007
        %v1088 = vpop.f32.mrf.mxu0
        %v1089 = vadd.f32 %v869, %v1088
        %v1090 = vpop.f32.mrf.mxu0
        %v1091 = vadd.f32 %v871, %v1090
        %1092 = vmatmul.bf16.gmra.mxu0 %v1010
        %v1093 = vpop.f32.mrf.mxu0
        %v1094 = vadd.f32 %v874, %v1093
        %v1095 = vpop.f32.mrf.mxu0
        %v1096 = vadd.f32 %v876, %v1095
        %1097 = vmatmul.bf16.gmra.mxu0 %v1013
        %v1098 = vpop.f32.mrf.mxu0
        %v1099 = vadd.f32 %v879, %v1098
        %v1100 = vpop.f32.mrf.mxu0
        %v1101 = vadd.f32 %v881, %v1100
        %1102 = vmatmul.bf16.gmra.mxu0 %v1016
        %v1103 = vpop.f32.mrf.mxu0
        %v1104 = vadd.f32 %v884, %v1103
        %v1105 = vpop.f32.mrf.mxu0
        %v1106 = vadd.f32 %v886, %v1105
        %1107 = vmatmul.bf16.gmra.mxu0 %v1019
        %v1108 = vpop.f32.mrf.mxu0
        %v1109 = vadd.f32 %v889, %v1108
        %v1110 = vpop.f32.mrf.mxu0
        %v1111 = vadd.f32 %v891, %v1110
        %1112 = vdwg.mxu0
        %vm1129 = vcmask 1042432
        %vm1130 = vcmask 1046532
        %vm1131 = vmor %vm1129, %vm1130
        %v1132 = vrot.slane %v256, 5
        %v1133 = vrot.slane %v1132, 4
        %v1134 = vrot.slane %v257, 5
        %v1135 = vsel %vm1131, %v1133, %v1134
        %v1136 = vrot.slane %v1134, 4
        %v1137 = vrot.slane %v258, 5
        %v1138 = vsel %vm1131, %v1136, %v1137
        %v1139 = vrot.slane %v259, 5
        %v1140 = vrot.slane %v1139, 4
        %v1141 = vrot.slane %v260, 5
        %v1142 = vsel %vm1131, %v1140, %v1141
        %v1143 = vrot.slane %v1141, 4
        %v1144 = vrot.slane %v261, 5
        %v1145 = vsel %vm1131, %v1143, %v1144
        %v1146 = vrot.slane %v262, 5
        %v1147 = vrot.slane %v1146, 4
        %v1148 = vrot.slane %v263, 5
        %v1149 = vsel %vm1131, %v1147, %v1148
        %v1150 = vrot.slane %v1148, 4
        %v1151 = vrot.slane %v264, 5
        %v1152 = vsel %vm1131, %v1150, %v1151
        %v1153 = vrot.slane %v265, 5
        %v1154 = vrot.slane %v1153, 4
        %v1155 = vrot.slane %v266, 5
        %v1156 = vsel %vm1131, %v1154, %v1155
        %v1157 = vrot.slane %v1155, 4
        %v1158 = vrot.slane %v267, 5
        %v1159 = vsel %vm1131, %v1157, %v1158
        %v1160 = vrot.slane %v268, 5
        %v1161 = vrot.slane %v1160, 4
        %v1162 = vrot.slane %v269, 5
        %v1163 = vsel %vm1131, %v1161, %v1162
        %v1164 = vrot.slane %v1162, 4
        %v1165 = vrot.slane %v270, 5
        %v1166 = vsel %vm1131, %v1164, %v1165
        %v1167 = vrot.slane %v271, 5
        %v1168 = vrot.slane %v1167, 4
        %v1169 = vrot.slane %v272, 5
        %v1170 = vsel %vm1131, %v1168, %v1169
        %v1171 = vrot.slane %v1169, 4
        %v1172 = vrot.slane %v273, 5
        %v1173 = vsel %vm1131, %v1171, %v1172
        %v1174 = vrot.slane %v274, 5
        %v1175 = vrot.slane %v1174, 4
        %v1176 = vrot.slane %v275, 5
        %v1177 = vsel %vm1131, %v1175, %v1176
        %v1178 = vrot.slane %v1176, 4
        %v1179 = vrot.slane %v276, 5
        %v1180 = vsel %vm1131, %v1178, %v1179
        %v1181 = vrot.slane %v277, 5
        %v1182 = vrot.slane %v1181, 4
        %v1183 = vrot.slane %v278, 5
        %v1184 = vsel %vm1131, %v1182, %v1183
        %v1185 = vrot.slane %v1183, 4
        %v1186 = vrot.slane %v279, 5
        %v1187 = vsel %vm1131, %v1185, %v1186
        %v1188 = vrot.slane %v280, 5
        %v1189 = vrot.slane %v1188, 4
        %v1190 = vrot.slane %v281, 5
        %v1191 = vsel %vm1131, %v1189, %v1190
        %v1192 = vrot.slane %v1190, 4
        %v1193 = vrot.slane %v282, 5
        %v1194 = vsel %vm1131, %v1192, %v1193
        %v1195 = vrot.slane %v283, 5
        %v1196 = vrot.slane %v1195, 4
        %v1197 = vrot.slane %v284, 5
        %v1198 = vsel %vm1131, %v1196, %v1197
        %v1199 = vrot.slane %v1197, 4
        %v1200 = vrot.slane %v285, 5
        %v1201 = vsel %vm1131, %v1199, %v1200
        %v1202 = vrot.slane %v286, 5
        %v1203 = vrot.slane %v1202, 4
        %v1204 = vrot.slane %v287, 5
        %v1205 = vsel %vm1131, %v1203, %v1204
        %v1206 = vrot.slane %v1204, 4
        %v1207 = vrot.slane %v288, 5
        %v1208 = vsel %vm1131, %v1206, %v1207
        %v1209 = vrot.slane %v289, 5
        %v1210 = vrot.slane %v1209, 4
        %v1211 = vrot.slane %v290, 5
        %v1212 = vsel %vm1131, %v1210, %v1211
        %v1213 = vrot.slane %v1211, 4
        %v1214 = vrot.slane %v291, 5
        %v1215 = vsel %vm1131, %v1213, %v1214
        %v1216 = vrot.slane %v292, 5
        %v1217 = vrot.slane %v1216, 4
        %v1218 = vrot.slane %v293, 5
        %v1219 = vsel %vm1131, %v1217, %v1218
        %v1220 = vrot.slane %v1218, 4
        %v1221 = vrot.slane %v294, 5
        %v1222 = vsel %vm1131, %v1220, %v1221
        %v1223 = vrot.slane %v295, 5
        %v1224 = vrot.slane %v1223, 4
        %v1225 = vrot.slane %v296, 5
        %v1226 = vsel %vm1131, %v1224, %v1225
        %v1227 = vrot.slane %v1225, 4
        %v1228 = vrot.slane %v297, 5
        %v1229 = vsel %vm1131, %v1227, %v1228
        %v1230 = vrot.slane %v298, 5
        %v1231 = vrot.slane %v1230, 4
        %v1232 = vrot.slane %v299, 5
        %v1233 = vsel %vm1131, %v1231, %v1232
        %v1234 = vrot.slane %v1232, 4
        %v1235 = vrot.slane %v300, 5
        %v1236 = vsel %vm1131, %v1234, %v1235
        %v1237 = vrot.slane %v301, 5
        %v1238 = vrot.slane %v1237, 4
        %v1239 = vrot.slane %v302, 5
        %v1240 = vsel %vm1131, %v1238, %v1239
        %v1241 = vrot.slane %v1239, 4
        %v1242 = vrot.slane %v303, 5
        %v1243 = vsel %vm1131, %v1241, %v1242
        %v1244 = vld [vmem:[%s248 + $0x4] sm:$0x3]
        %v1245 = vunpack.c.l.b16 %v1135
        %v1246 = vunpack.c.l.b16 %v1138
        %v1247 = vunpack.c.l.b16 %v1142
        %v1248 = vunpack.c.l.b16 %v1145
        %v1249 = vunpack.c.l.b16 %v1149
        %v1250 = vunpack.c.l.b16 %v1152
        %v1251 = vunpack.c.l.b16 %v1156
        %v1252 = vunpack.c.l.b16 %v1159
        %v1253 = vunpack.c.l.b16 %v1163
        %v1254 = vunpack.c.l.b16 %v1166
        %v1255 = vunpack.c.l.b16 %v1170
        %v1256 = vunpack.c.l.b16 %v1173
        %v1257 = vunpack.c.l.b16 %v1177
        %v1258 = vunpack.c.l.b16 %v1180
        %v1259 = vunpack.c.l.b16 %v1184
        %v1260 = vunpack.c.l.b16 %v1187
        %v1261 = vunpack.c.l.b16 %v1191
        %v1262 = vunpack.c.l.b16 %v1194
        %v1263 = vunpack.c.l.b16 %v1198
        %v1264 = vunpack.c.l.b16 %v1201
        %v1265 = vunpack.c.l.b16 %v1205
        %v1266 = vunpack.c.l.b16 %v1208
        %v1267 = vunpack.c.l.b16 %v1212
        %v1268 = vunpack.c.l.b16 %v1215
        %v1269 = vunpack.c.l.b16 %v1219
        %v1270 = vunpack.c.l.b16 %v1222
        %v1271 = vunpack.c.l.b16 %v1226
        %v1272 = vunpack.c.l.b16 %v1229
        %v1273 = vunpack.c.l.b16 %v1233
        %v1274 = vunpack.c.l.b16 %v1236
        %v1275 = vunpack.c.l.b16 %v1240
        %v1276 = vunpack.c.l.b16 %v1243
        %v1277 = vpack.c.b16 %v1246, %v1245
        %v1278 = vpack.c.b16 %v1248, %v1247
        %v1279 = vpack.c.b16 %v1250, %v1249
        %v1280 = vpack.c.b16 %v1252, %v1251
        %v1281 = vpack.c.b16 %v1254, %v1253
        %v1282 = vpack.c.b16 %v1256, %v1255
        %v1283 = vpack.c.b16 %v1258, %v1257
        %v1284 = vpack.c.b16 %v1260, %v1259
        %v1285 = vpack.c.b16 %v1262, %v1261
        %v1286 = vpack.c.b16 %v1264, %v1263
        %v1287 = vpack.c.b16 %v1266, %v1265
        %v1288 = vpack.c.b16 %v1268, %v1267
        %v1289 = vpack.c.b16 %v1270, %v1269
        %v1290 = vpack.c.b16 %v1272, %v1271
        %v1291 = vpack.c.b16 %v1274, %v1273
        %v1292 = vpack.c.b16 %v1276, %v1275
        %v1294 = vsel %vm751, %v1277, 0
        %v1297 = vsel %vm751, %v1278, 0
        %v1300 = vsel %vm751, %v1279, 0
        %v1303 = vsel %vm751, %v1280, 0
        %v1306 = vsel %vm751, %v1281, 0
        %v1309 = vsel %vm751, %v1282, 0
        %v1312 = vsel %vm751, %v1283, 0
        %v1315 = vsel %vm751, %v1284, 0
        %v1318 = vsel %vm751, %v1285, 0
        %v1321 = vsel %vm751, %v1286, 0
        %v1324 = vsel %vm751, %v1287, 0
        %v1327 = vsel %vm751, %v1288, 0
        %v1330 = vsel %vm751, %v1289, 0
        %v1333 = vsel %vm751, %v1290, 0
        %v1336 = vsel %vm751, %v1291, 0
        %v1339 = vsel %vm751, %v1292, 0
        %v1342 = vsel %vm800, %v1244, 0
        %1344 = vmatpush.bf16.msra.mxu0 0
        %1345 = vmatpush.bf16.msra.mxu0 0
        %1346 = vmatpush.bf16.msra.mxu0 0
        %1347 = vmatpush.bf16.msra.mxu0 0
        %1348 = vmatpush.bf16.msra.mxu0 0
        %1349 = vmatpush.bf16.msra.mxu0 0
        %1350 = vmatpush.bf16.msra.mxu0 0
        %1351 = vmatpush.bf16.msra.mxu0 %v1342
        %1352 = vmatmul.bf16.gmra.mxu0 %v1294
        %v1353 = vpop.f32.mrf.mxu0
        %v1354 = vadd.f32 0.0, %v1353
        %v1355 = vpop.f32.mrf.mxu0
        %v1356 = vadd.f32 0.0, %v1355
        %1357 = vmatmul.bf16.gmra.mxu0 %v1297
        %v1358 = vpop.f32.mrf.mxu0
        %v1359 = vadd.f32 0.0, %v1358
        %v1360 = vpop.f32.mrf.mxu0
        %v1361 = vadd.f32 0.0, %v1360
        %1362 = vmatmul.bf16.gmra.mxu0 %v1300
        %v1363 = vpop.f32.mrf.mxu0
        %v1364 = vadd.f32 0.0, %v1363
        %v1365 = vpop.f32.mrf.mxu0
        %v1366 = vadd.f32 0.0, %v1365
        %1367 = vmatmul.bf16.gmra.mxu0 %v1303
        %v1368 = vpop.f32.mrf.mxu0
        %v1369 = vadd.f32 0.0, %v1368
        %v1370 = vpop.f32.mrf.mxu0
        %v1371 = vadd.f32 0.0, %v1370
        %1372 = vmatmul.bf16.gmra.mxu0 %v1306
        %v1373 = vpop.f32.mrf.mxu0
        %v1374 = vadd.f32 0.0, %v1373
        %v1375 = vpop.f32.mrf.mxu0
        %v1376 = vadd.f32 0.0, %v1375
        %1377 = vmatmul.bf16.gmra.mxu0 %v1309
        %v1378 = vpop.f32.mrf.mxu0
        %v1379 = vadd.f32 0.0, %v1378
        %v1380 = vpop.f32.mrf.mxu0
        %v1381 = vadd.f32 0.0, %v1380
        %1382 = vmatmul.bf16.gmra.mxu0 %v1312
        %v1383 = vpop.f32.mrf.mxu0
        %v1384 = vadd.f32 0.0, %v1383
        %v1385 = vpop.f32.mrf.mxu0
        %v1386 = vadd.f32 0.0, %v1385
        %1387 = vmatmul.bf16.gmra.mxu0 %v1315
        %v1388 = vpop.f32.mrf.mxu0
        %v1389 = vadd.f32 0.0, %v1388
        %v1390 = vpop.f32.mrf.mxu0
        %v1391 = vadd.f32 0.0, %v1390
        %1392 = vmatmul.bf16.gmra.mxu0 %v1318
        %v1393 = vpop.f32.mrf.mxu0
        %v1394 = vadd.f32 0.0, %v1393
        %v1395 = vpop.f32.mrf.mxu0
        %v1396 = vadd.f32 0.0, %v1395
        %1397 = vmatmul.bf16.gmra.mxu0 %v1321
        %v1398 = vpop.f32.mrf.mxu0
        %v1399 = vadd.f32 0.0, %v1398
        %v1400 = vpop.f32.mrf.mxu0
        %v1401 = vadd.f32 0.0, %v1400
        %1402 = vmatmul.bf16.gmra.mxu0 %v1324
        %v1403 = vpop.f32.mrf.mxu0
        %v1404 = vadd.f32 0.0, %v1403
        %v1405 = vpop.f32.mrf.mxu0
        %v1406 = vadd.f32 0.0, %v1405
        %1407 = vmatmul.bf16.gmra.mxu0 %v1327
        %v1408 = vpop.f32.mrf.mxu0
        %v1409 = vadd.f32 0.0, %v1408
        %v1410 = vpop.f32.mrf.mxu0
        %v1411 = vadd.f32 0.0, %v1410
        %1412 = vmatmul.bf16.gmra.mxu0 %v1330
        %v1413 = vpop.f32.mrf.mxu0
        %v1414 = vadd.f32 0.0, %v1413
        %v1415 = vpop.f32.mrf.mxu0
        %v1416 = vadd.f32 0.0, %v1415
        %1417 = vmatmul.bf16.gmra.mxu0 %v1333
        %v1418 = vpop.f32.mrf.mxu0
        %v1419 = vadd.f32 0.0, %v1418
        %v1420 = vpop.f32.mrf.mxu0
        %v1421 = vadd.f32 0.0, %v1420
        %1422 = vmatmul.bf16.gmra.mxu0 %v1336
        %v1423 = vpop.f32.mrf.mxu0
        %v1424 = vadd.f32 0.0, %v1423
        %v1425 = vpop.f32.mrf.mxu0
        %v1426 = vadd.f32 0.0, %v1425
        %1427 = vmatmul.bf16.gmra.mxu0 %v1339
        %v1428 = vpop.f32.mrf.mxu0
        %v1429 = vadd.f32 0.0, %v1428
        %v1430 = vpop.f32.mrf.mxu0
        %v1431 = vadd.f32 0.0, %v1430
        %1432 = vdwg.mxu0
        %v1433 = vadd.f32 %v1034, %v1354
        %v1434 = vadd.f32 %v1036, %v1356
        %v1435 = vadd.f32 %v1039, %v1359
        %v1436 = vadd.f32 %v1041, %v1361
        %v1437 = vadd.f32 %v1044, %v1364
        %v1438 = vadd.f32 %v1046, %v1366
        %v1439 = vadd.f32 %v1049, %v1369
        %v1440 = vadd.f32 %v1051, %v1371
        %v1441 = vadd.f32 %v1054, %v1374
        %v1442 = vadd.f32 %v1056, %v1376
        %v1443 = vadd.f32 %v1059, %v1379
        %v1444 = vadd.f32 %v1061, %v1381
        %v1445 = vadd.f32 %v1064, %v1384
        %v1446 = vadd.f32 %v1066, %v1386
        %v1447 = vadd.f32 %v1069, %v1389
        %v1448 = vadd.f32 %v1071, %v1391
        %v1449 = vadd.f32 %v1074, %v1394
        %v1450 = vadd.f32 %v1076, %v1396
        %v1451 = vadd.f32 %v1079, %v1399
        %v1452 = vadd.f32 %v1081, %v1401
        %v1453 = vadd.f32 %v1084, %v1404
        %v1454 = vadd.f32 %v1086, %v1406
        %v1455 = vadd.f32 %v1089, %v1409
        %v1456 = vadd.f32 %v1091, %v1411
        %v1457 = vadd.f32 %v1094, %v1414
        %v1458 = vadd.f32 %v1096, %v1416
        %v1459 = vadd.f32 %v1099, %v1419
        %v1460 = vadd.f32 %v1101, %v1421
        %v1461 = vadd.f32 %v1104, %v1424
        %v1462 = vadd.f32 %v1106, %v1426
        %v1463 = vadd.f32 %v1109, %v1429
        %v1464 = vadd.f32 %v1111, %v1431
        %v1465 = vld [vmem:[%s248 + $0x4] sm:$0xc]
        %v1468 = vunpack.c.l.b16 %v304
        %v1469 = vunpack.c.l.b16 %v305
        %v1470 = vpack.c.b16 %v1469, %v1468
        %v1472 = vunpack.c.l.b16 %v1465
        %v1473 = vpack.c.b16 %v1472, %v1472
        %v1474 = vrot.slane %v1473, 2
        %v1476 = vsel %vm751, %v1470, 0
        %v1479 = vsel %vm800, %v1474, 0
        %1481 = vmatpush.bf16.msra.mxu0 0
        %1482 = vmatpush.bf16.msra.mxu0 0
        %1483 = vmatpush.bf16.msra.mxu0 0
        %1484 = vmatpush.bf16.msra.mxu0 0
        %1485 = vmatpush.bf16.msra.mxu0 0
        %1486 = vmatpush.bf16.msra.mxu0 0
        %1487 = vmatpush.bf16.msra.mxu0 0
        %1488 = vmatpush.bf16.msra.mxu0 %v1479
        %1489 = vmatmul.bf16.gmra.mxu0 %v977
        %v1490 = vpop.f32.mrf.mxu0
        %v1491 = vadd.f32 0.0, %v1490
        %v1492 = vpop.f32.mrf.mxu0
        %v1493 = vadd.f32 0.0, %v1492
        %1494 = vmatmul.bf16.gmra.mxu0 %v980
        %v1495 = vpop.f32.mrf.mxu0
        %v1496 = vadd.f32 0.0, %v1495
        %v1497 = vpop.f32.mrf.mxu0
        %v1498 = vadd.f32 0.0, %v1497
        %1499 = vmatmul.bf16.gmra.mxu0 %v983
        %v1500 = vpop.f32.mrf.mxu0
        %v1501 = vadd.f32 0.0, %v1500
        %v1502 = vpop.f32.mrf.mxu0
        %v1503 = vadd.f32 0.0, %v1502
        %1504 = vmatmul.bf16.gmra.mxu0 %v986
        %v1505 = vpop.f32.mrf.mxu0
        %v1506 = vadd.f32 0.0, %v1505
        %v1507 = vpop.f32.mrf.mxu0
        %v1508 = vadd.f32 0.0, %v1507
        %1509 = vmatmul.bf16.gmra.mxu0 %v989
        %v1510 = vpop.f32.mrf.mxu0
        %v1511 = vadd.f32 0.0, %v1510
        %v1512 = vpop.f32.mrf.mxu0
        %v1513 = vadd.f32 0.0, %v1512
        %1514 = vmatmul.bf16.gmra.mxu0 %v992
        %v1515 = vpop.f32.mrf.mxu0
        %v1516 = vadd.f32 0.0, %v1515
        %v1517 = vpop.f32.mrf.mxu0
        %v1518 = vadd.f32 0.0, %v1517
        %1519 = vmatmul.bf16.gmra.mxu0 %v995
        %v1520 = vpop.f32.mrf.mxu0
        %v1521 = vadd.f32 0.0, %v1520
        %v1522 = vpop.f32.mrf.mxu0
        %v1523 = vadd.f32 0.0, %v1522
        %1524 = vmatmul.bf16.gmra.mxu0 %v998
        %v1525 = vpop.f32.mrf.mxu0
        %v1526 = vadd.f32 0.0, %v1525
        %v1527 = vpop.f32.mrf.mxu0
        %v1528 = vadd.f32 0.0, %v1527
        %1529 = vmatmul.bf16.gmra.mxu0 %v1001
        %v1530 = vpop.f32.mrf.mxu0
        %v1531 = vadd.f32 0.0, %v1530
        %v1532 = vpop.f32.mrf.mxu0
        %v1533 = vadd.f32 0.0, %v1532
        %1534 = vmatmul.bf16.gmra.mxu0 %v1004
        %v1535 = vpop.f32.mrf.mxu0
        %v1536 = vadd.f32 0.0, %v1535
        %v1537 = vpop.f32.mrf.mxu0
        %v1538 = vadd.f32 0.0, %v1537
        %1539 = vmatmul.bf16.gmra.mxu0 %v1007
        %v1540 = vpop.f32.mrf.mxu0
        %v1541 = vadd.f32 0.0, %v1540
        %v1542 = vpop.f32.mrf.mxu0
        %v1543 = vadd.f32 0.0, %v1542
        %1544 = vmatmul.bf16.gmra.mxu0 %v1010
        %v1545 = vpop.f32.mrf.mxu0
        %v1546 = vadd.f32 0.0, %v1545
        %v1547 = vpop.f32.mrf.mxu0
        %v1548 = vadd.f32 0.0, %v1547
        %1549 = vmatmul.bf16.gmra.mxu0 %v1013
        %v1550 = vpop.f32.mrf.mxu0
        %v1551 = vadd.f32 0.0, %v1550
        %v1552 = vpop.f32.mrf.mxu0
        %v1553 = vadd.f32 0.0, %v1552
        %1554 = vmatmul.bf16.gmra.mxu0 %v1016
        %v1555 = vpop.f32.mrf.mxu0
        %v1556 = vadd.f32 0.0, %v1555
        %v1557 = vpop.f32.mrf.mxu0
        %v1558 = vadd.f32 0.0, %v1557
        %1559 = vmatmul.bf16.gmra.mxu0 %v1019
        %v1560 = vpop.f32.mrf.mxu0
        %v1561 = vadd.f32 0.0, %v1560
        %v1562 = vpop.f32.mrf.mxu0
        %v1563 = vadd.f32 0.0, %v1562
        %1564 = vmatmul.bf16.gmra.mxu0 %v1476
        %v1565 = vpop.f32.mrf.mxu0
        %v1566 = vadd.f32 0.0, %v1565
        %v1567 = vpop.f32.mrf.mxu0
        %v1568 = vadd.f32 0.0, %v1567
        %1569 = vdwg.mxu0
        %v1570 = vadd.f32 %v1433, %v1491
        %v1571 = vadd.f32 %v1434, %v1493
        %v1572 = vadd.f32 %v1435, %v1496
        %v1573 = vadd.f32 %v1436, %v1498
        %v1574 = vadd.f32 %v1437, %v1501
        %v1575 = vadd.f32 %v1438, %v1503
        %v1576 = vadd.f32 %v1439, %v1506
        %v1577 = vadd.f32 %v1440, %v1508
        %v1578 = vadd.f32 %v1441, %v1511
        %v1579 = vadd.f32 %v1442, %v1513
        %v1580 = vadd.f32 %v1443, %v1516
        %v1581 = vadd.f32 %v1444, %v1518
        %v1582 = vadd.f32 %v1445, %v1521
        %v1583 = vadd.f32 %v1446, %v1523
        %v1584 = vadd.f32 %v1447, %v1526
        %v1585 = vadd.f32 %v1448, %v1528
        %v1586 = vadd.f32 %v1449, %v1531
        %v1587 = vadd.f32 %v1450, %v1533
        %v1588 = vadd.f32 %v1451, %v1536
        %v1589 = vadd.f32 %v1452, %v1538
        %v1590 = vadd.f32 %v1453, %v1541
        %v1591 = vadd.f32 %v1454, %v1543
        %v1592 = vadd.f32 %v1455, %v1546
        %v1593 = vadd.f32 %v1456, %v1548
        %v1594 = vadd.f32 %v1457, %v1551
        %v1595 = vadd.f32 %v1458, %v1553
        %v1596 = vadd.f32 %v1459, %v1556
        %v1597 = vadd.f32 %v1460, %v1558
        %v1598 = vadd.f32 %v1461, %v1561
        %v1599 = vadd.f32 %v1462, %v1563
        %v1600 = vadd.f32 %v1463, %v1566
        %v1601 = vadd.f32 %v1464, %v1568
        %v1603 = vshrl.u32 %v304, 16
        %v1605 = vrot.slane %v1603, 4
        %v1606 = vshll.u32 %v304, 16
        %v1608 = vrot.slane %v1606, 5
        %v1609 = vor.u32 %v1605, %v1608
        %v1610 = vrot.slane %v1609, 4
        %v1612 = vshll.u32 %v305, 16
        %v1614 = vrot.slane %v1612, 5
        %v1615 = vsel %vm313, %v1610, %v1614
        %v1616 = vshrl.u32 %v305, 16
        %v1618 = vrot.slane %v1616, 4
        %v1619 = vor.u32 %v1618, %v1614
        %v1620 = vrot.slane %v1619, 4
        %v1622 = vshll.u32 %v306, 16
        %v1624 = vrot.slane %v1622, 5
        %v1625 = vsel %vm313, %v1620, %v1624
        %v1626 = vld [vmem:[%s248 + $0x8] sm:$0x3]
        %v1627 = vunpack.c.l.b16 %v1615
        %v1628 = vunpack.c.l.b16 %v1625
        %v1629 = vpack.c.b16 %v1628, %v1627
        %v1631 = vsel %vm751, %v1629, 0
        %v1634 = vsel %vm800, %v1626, 0
        %1636 = vmatpush.bf16.msra.mxu0 0
        %1637 = vmatpush.bf16.msra.mxu0 0
        %1638 = vmatpush.bf16.msra.mxu0 0
        %1639 = vmatpush.bf16.msra.mxu0 0
        %1640 = vmatpush.bf16.msra.mxu0 0
        %1641 = vmatpush.bf16.msra.mxu0 0
        %1642 = vmatpush.bf16.msra.mxu0 0
        %1643 = vmatpush.bf16.msra.mxu0 %v1634
        %1644 = vmatmul.bf16.gmra.mxu0 %v756
        %v1645 = vpop.f32.mrf.mxu0
        %v1646 = vadd.f32 0.0, %v1645
        %v1647 = vpop.f32.mrf.mxu0
        %v1648 = vadd.f32 0.0, %v1647
        %1649 = vmatmul.bf16.gmra.mxu0 %v759
        %v1650 = vpop.f32.mrf.mxu0
        %v1651 = vadd.f32 0.0, %v1650
        %v1652 = vpop.f32.mrf.mxu0
        %v1653 = vadd.f32 0.0, %v1652
        %1654 = vmatmul.bf16.gmra.mxu0 %v762
        %v1655 = vpop.f32.mrf.mxu0
        %v1656 = vadd.f32 0.0, %v1655
        %v1657 = vpop.f32.mrf.mxu0
        %v1658 = vadd.f32 0.0, %v1657
        %1659 = vmatmul.bf16.gmra.mxu0 %v765
        %v1660 = vpop.f32.mrf.mxu0
        %v1661 = vadd.f32 0.0, %v1660
        %v1662 = vpop.f32.mrf.mxu0
        %v1663 = vadd.f32 0.0, %v1662
        %1664 = vmatmul.bf16.gmra.mxu0 %v768
        %v1665 = vpop.f32.mrf.mxu0
        %v1666 = vadd.f32 0.0, %v1665
        %v1667 = vpop.f32.mrf.mxu0
        %v1668 = vadd.f32 0.0, %v1667
        %1669 = vmatmul.bf16.gmra.mxu0 %v771
        %v1670 = vpop.f32.mrf.mxu0
        %v1671 = vadd.f32 0.0, %v1670
        %v1672 = vpop.f32.mrf.mxu0
        %v1673 = vadd.f32 0.0, %v1672
        %1674 = vmatmul.bf16.gmra.mxu0 %v774
        %v1675 = vpop.f32.mrf.mxu0
        %v1676 = vadd.f32 0.0, %v1675
        %v1677 = vpop.f32.mrf.mxu0
        %v1678 = vadd.f32 0.0, %v1677
        %1679 = vmatmul.bf16.gmra.mxu0 %v777
        %v1680 = vpop.f32.mrf.mxu0
        %v1681 = vadd.f32 0.0, %v1680
        %v1682 = vpop.f32.mrf.mxu0
        %v1683 = vadd.f32 0.0, %v1682
        %1684 = vmatmul.bf16.gmra.mxu0 %v780
        %v1685 = vpop.f32.mrf.mxu0
        %v1686 = vadd.f32 0.0, %v1685
        %v1687 = vpop.f32.mrf.mxu0
        %v1688 = vadd.f32 0.0, %v1687
        %1689 = vmatmul.bf16.gmra.mxu0 %v783
        %v1690 = vpop.f32.mrf.mxu0
        %v1691 = vadd.f32 0.0, %v1690
        %v1692 = vpop.f32.mrf.mxu0
        %v1693 = vadd.f32 0.0, %v1692
        %1694 = vmatmul.bf16.gmra.mxu0 %v786
        %v1695 = vpop.f32.mrf.mxu0
        %v1696 = vadd.f32 0.0, %v1695
        %v1697 = vpop.f32.mrf.mxu0
        %v1698 = vadd.f32 0.0, %v1697
        %1699 = vmatmul.bf16.gmra.mxu0 %v789
        %v1700 = vpop.f32.mrf.mxu0
        %v1701 = vadd.f32 0.0, %v1700
        %v1702 = vpop.f32.mrf.mxu0
        %v1703 = vadd.f32 0.0, %v1702
        %1704 = vmatmul.bf16.gmra.mxu0 %v792
        %v1705 = vpop.f32.mrf.mxu0
        %v1706 = vadd.f32 0.0, %v1705
        %v1707 = vpop.f32.mrf.mxu0
        %v1708 = vadd.f32 0.0, %v1707
        %1709 = vmatmul.bf16.gmra.mxu0 %v795
        %v1710 = vpop.f32.mrf.mxu0
        %v1711 = vadd.f32 0.0, %v1710
        %v1712 = vpop.f32.mrf.mxu0
        %v1713 = vadd.f32 0.0, %v1712
        %1714 = vmatmul.bf16.gmra.mxu0 %v798
        %v1715 = vpop.f32.mrf.mxu0
        %v1716 = vadd.f32 0.0, %v1715
        %v1717 = vpop.f32.mrf.mxu0
        %v1718 = vadd.f32 0.0, %v1717
        %1719 = vmatmul.bf16.gmra.mxu0 %v1631
        %v1720 = vpop.f32.mrf.mxu0
        %v1721 = vadd.f32 0.0, %v1720
        %v1722 = vpop.f32.mrf.mxu0
        %v1723 = vadd.f32 0.0, %v1722
        %1724 = vdwg.mxu0
        %v1725 = vadd.f32 %v1570, %v1646
        %v1726 = vadd.f32 %v1571, %v1648
        %v1727 = vadd.f32 %v1572, %v1651
        %v1728 = vadd.f32 %v1573, %v1653
        %v1729 = vadd.f32 %v1574, %v1656
        %v1730 = vadd.f32 %v1575, %v1658
        %v1731 = vadd.f32 %v1576, %v1661
        %v1732 = vadd.f32 %v1577, %v1663
        %v1733 = vadd.f32 %v1578, %v1666
        %v1734 = vadd.f32 %v1579, %v1668
        %v1735 = vadd.f32 %v1580, %v1671
        %v1736 = vadd.f32 %v1581, %v1673
        %v1737 = vadd.f32 %v1582, %v1676
        %v1738 = vadd.f32 %v1583, %v1678
        %v1739 = vadd.f32 %v1584, %v1681
        %v1740 = vadd.f32 %v1585, %v1683
        %v1741 = vadd.f32 %v1586, %v1686
        %v1742 = vadd.f32 %v1587, %v1688
        %v1743 = vadd.f32 %v1588, %v1691
        %v1744 = vadd.f32 %v1589, %v1693
        %v1745 = vadd.f32 %v1590, %v1696
        %v1746 = vadd.f32 %v1591, %v1698
        %v1747 = vadd.f32 %v1592, %v1701
        %v1748 = vadd.f32 %v1593, %v1703
        %v1749 = vadd.f32 %v1594, %v1706
        %v1750 = vadd.f32 %v1595, %v1708
        %v1751 = vadd.f32 %v1596, %v1711
        %v1752 = vadd.f32 %v1597, %v1713
        %v1753 = vadd.f32 %v1598, %v1716
        %v1754 = vadd.f32 %v1599, %v1718
        %v1755 = vadd.f32 %v1600, %v1721
        %v1756 = vadd.f32 %v1601, %v1723
        %v1758 = vrot.slane %v304, 5
        %v1759 = vrot.slane %v1758, 4
        %v1760 = vrot.slane %v305, 5
        %v1761 = vsel %vm1131, %v1759, %v1760
        %v1762 = vrot.slane %v1760, 4
        %v1763 = vrot.slane %v306, 5
        %v1764 = vsel %vm1131, %v1762, %v1763
        %v1765 = vld [vmem:[%s248 + $0x8] sm:$0xc]
        %v1766 = vunpack.c.l.b16 %v1761
        %v1767 = vunpack.c.l.b16 %v1764
        %v1768 = vpack.c.b16 %v1767, %v1766
        %v1770 = vunpack.c.l.b16 %v1765
        %v1771 = vpack.c.b16 %v1770, %v1770
        %v1772 = vrot.slane %v1771, 2
        %v1774 = vsel %vm751, %v1768, 0
        %v1777 = vsel %vm800, %v1772, 0
        %1779 = vmatpush.bf16.msra.mxu0 0
        %1780 = vmatpush.bf16.msra.mxu0 0
        %1781 = vmatpush.bf16.msra.mxu0 0
        %1782 = vmatpush.bf16.msra.mxu0 0
        %1783 = vmatpush.bf16.msra.mxu0 0
        %1784 = vmatpush.bf16.msra.mxu0 0
        %1785 = vmatpush.bf16.msra.mxu0 0
        %1786 = vmatpush.bf16.msra.mxu0 %v1777
        %1787 = vmatmul.bf16.gmra.mxu0 %v1297
        %v1788 = vpop.f32.mrf.mxu0
        %v1789 = vadd.f32 0.0, %v1788
        %v1790 = vpop.f32.mrf.mxu0
        %v1791 = vadd.f32 0.0, %v1790
        %1792 = vmatmul.bf16.gmra.mxu0 %v1300
        %v1793 = vpop.f32.mrf.mxu0
        %v1794 = vadd.f32 0.0, %v1793
        %v1795 = vpop.f32.mrf.mxu0
        %v1796 = vadd.f32 0.0, %v1795
        %1797 = vmatmul.bf16.gmra.mxu0 %v1303
        %v1798 = vpop.f32.mrf.mxu0
        %v1799 = vadd.f32 0.0, %v1798
        %v1800 = vpop.f32.mrf.mxu0
        %v1801 = vadd.f32 0.0, %v1800
        %1802 = vmatmul.bf16.gmra.mxu0 %v1306
        %v1803 = vpop.f32.mrf.mxu0
        %v1804 = vadd.f32 0.0, %v1803
        %v1805 = vpop.f32.mrf.mxu0
        %v1806 = vadd.f32 0.0, %v1805
        %1807 = vmatmul.bf16.gmra.mxu0 %v1309
        %v1808 = vpop.f32.mrf.mxu0
        %v1809 = vadd.f32 0.0, %v1808
        %v1810 = vpop.f32.mrf.mxu0
        %v1811 = vadd.f32 0.0, %v1810
        %1812 = vmatmul.bf16.gmra.mxu0 %v1312
        %v1813 = vpop.f32.mrf.mxu0
        %v1814 = vadd.f32 0.0, %v1813
        %v1815 = vpop.f32.mrf.mxu0
        %v1816 = vadd.f32 0.0, %v1815
        %1817 = vmatmul.bf16.gmra.mxu0 %v1315
        %v1818 = vpop.f32.mrf.mxu0
        %v1819 = vadd.f32 0.0, %v1818
        %v1820 = vpop.f32.mrf.mxu0
        %v1821 = vadd.f32 0.0, %v1820
        %1822 = vmatmul.bf16.gmra.mxu0 %v1318
        %v1823 = vpop.f32.mrf.mxu0
        %v1824 = vadd.f32 0.0, %v1823
        %v1825 = vpop.f32.mrf.mxu0
        %v1826 = vadd.f32 0.0, %v1825
        %1827 = vmatmul.bf16.gmra.mxu0 %v1321
        %v1828 = vpop.f32.mrf.mxu0
        %v1829 = vadd.f32 0.0, %v1828
        %v1830 = vpop.f32.mrf.mxu0
        %v1831 = vadd.f32 0.0, %v1830
        %1832 = vmatmul.bf16.gmra.mxu0 %v1324
        %v1833 = vpop.f32.mrf.mxu0
        %v1834 = vadd.f32 0.0, %v1833
        %v1835 = vpop.f32.mrf.mxu0
        %v1836 = vadd.f32 0.0, %v1835
        %1837 = vmatmul.bf16.gmra.mxu0 %v1327
        %v1838 = vpop.f32.mrf.mxu0
        %v1839 = vadd.f32 0.0, %v1838
        %v1840 = vpop.f32.mrf.mxu0
        %v1841 = vadd.f32 0.0, %v1840
        %1842 = vmatmul.bf16.gmra.mxu0 %v1330
        %v1843 = vpop.f32.mrf.mxu0
        %v1844 = vadd.f32 0.0, %v1843
        %v1845 = vpop.f32.mrf.mxu0
        %v1846 = vadd.f32 0.0, %v1845
        %1847 = vmatmul.bf16.gmra.mxu0 %v1333
        %v1848 = vpop.f32.mrf.mxu0
        %v1849 = vadd.f32 0.0, %v1848
        %v1850 = vpop.f32.mrf.mxu0
        %v1851 = vadd.f32 0.0, %v1850
        %1852 = vmatmul.bf16.gmra.mxu0 %v1336
        %v1853 = vpop.f32.mrf.mxu0
        %v1854 = vadd.f32 0.0, %v1853
        %v1855 = vpop.f32.mrf.mxu0
        %v1856 = vadd.f32 0.0, %v1855
        %1857 = vmatmul.bf16.gmra.mxu0 %v1339
        %v1858 = vpop.f32.mrf.mxu0
        %v1859 = vadd.f32 0.0, %v1858
        %v1860 = vpop.f32.mrf.mxu0
        %v1861 = vadd.f32 0.0, %v1860
        %1862 = vmatmul.bf16.gmra.mxu0 %v1774
        %v1863 = vpop.f32.mrf.mxu0
        %v1864 = vadd.f32 0.0, %v1863
        %v1865 = vpop.f32.mrf.mxu0
        %v1866 = vadd.f32 0.0, %v1865
        %1867 = vdwg.mxu0
        %v1868 = vadd.f32 %v1725, %v1789
        %v1869 = vadd.f32 %v1726, %v1791
        %v1870 = vadd.f32 %v1727, %v1794
        %v1871 = vadd.f32 %v1728, %v1796
        %v1872 = vadd.f32 %v1729, %v1799
        %v1873 = vadd.f32 %v1730, %v1801
        %v1874 = vadd.f32 %v1731, %v1804
        %v1875 = vadd.f32 %v1732, %v1806
        %v1876 = vadd.f32 %v1733, %v1809
        %v1877 = vadd.f32 %v1734, %v1811
        %v1878 = vadd.f32 %v1735, %v1814
        %v1879 = vadd.f32 %v1736, %v1816
        %v1880 = vadd.f32 %v1737, %v1819
        %v1881 = vadd.f32 %v1738, %v1821
        %v1882 = vadd.f32 %v1739, %v1824
        %v1883 = vadd.f32 %v1740, %v1826
        %v1884 = vadd.f32 %v1741, %v1829
        %v1885 = vadd.f32 %v1742, %v1831
        %v1886 = vadd.f32 %v1743, %v1834
        %v1887 = vadd.f32 %v1744, %v1836
        %v1888 = vadd.f32 %v1745, %v1839
        %v1889 = vadd.f32 %v1746, %v1841
        %v1890 = vadd.f32 %v1747, %v1844
        %v1891 = vadd.f32 %v1748, %v1846
        %v1892 = vadd.f32 %v1749, %v1849
        %v1893 = vadd.f32 %v1750, %v1851
        %v1894 = vadd.f32 %v1751, %v1854
        %v1895 = vadd.f32 %v1752, %v1856
        %v1896 = vadd.f32 %v1753, %v1859
        %v1897 = vadd.f32 %v1754, %v1861
        %v1898 = vadd.f32 %v1755, %v1864
        %v1899 = vadd.f32 %v1756, %v1866
        %v1900 = vld [vmem:[%s248 + $0xc] sm:$0x3]
        %v1903 = vunpack.c.l.b16 %v307
        %v1904 = vunpack.c.l.b16 %v308
        %v1905 = vpack.c.b16 %v1904, %v1903
        %v1907 = vsel %vm751, %v1905, 0
        %v1910 = vsel %vm800, %v1900, 0
        %1912 = vmatpush.bf16.msra.mxu0 0
        %1913 = vmatpush.bf16.msra.mxu0 0
        %1914 = vmatpush.bf16.msra.mxu0 0
        %1915 = vmatpush.bf16.msra.mxu0 0
        %1916 = vmatpush.bf16.msra.mxu0 0
        %1917 = vmatpush.bf16.msra.mxu0 0
        %1918 = vmatpush.bf16.msra.mxu0 0
        %1919 = vmatpush.bf16.msra.mxu0 %v1910
        %1920 = vmatmul.bf16.gmra.mxu0 %v980
        %v1921 = vpop.f32.mrf.mxu0
        %v1922 = vadd.f32 0.0, %v1921
        %v1923 = vpop.f32.mrf.mxu0
        %v1924 = vadd.f32 0.0, %v1923
        %1925 = vmatmul.bf16.gmra.mxu0 %v983
        %v1926 = vpop.f32.mrf.mxu0
        %v1927 = vadd.f32 0.0, %v1926
        %v1928 = vpop.f32.mrf.mxu0
        %v1929 = vadd.f32 0.0, %v1928
        %1930 = vmatmul.bf16.gmra.mxu0 %v986
        %v1931 = vpop.f32.mrf.mxu0
        %v1932 = vadd.f32 0.0, %v1931
        %v1933 = vpop.f32.mrf.mxu0
        %v1934 = vadd.f32 0.0, %v1933
        %1935 = vmatmul.bf16.gmra.mxu0 %v989
        %v1936 = vpop.f32.mrf.mxu0
        %v1937 = vadd.f32 0.0, %v1936
        %v1938 = vpop.f32.mrf.mxu0
        %v1939 = vadd.f32 0.0, %v1938
        %1940 = vmatmul.bf16.gmra.mxu0 %v992
        %v1941 = vpop.f32.mrf.mxu0
        %v1942 = vadd.f32 0.0, %v1941
        %v1943 = vpop.f32.mrf.mxu0
        %v1944 = vadd.f32 0.0, %v1943
        %1945 = vmatmul.bf16.gmra.mxu0 %v995
        %v1946 = vpop.f32.mrf.mxu0
        %v1947 = vadd.f32 0.0, %v1946
        %v1948 = vpop.f32.mrf.mxu0
        %v1949 = vadd.f32 0.0, %v1948
        %1950 = vmatmul.bf16.gmra.mxu0 %v998
        %v1951 = vpop.f32.mrf.mxu0
        %v1952 = vadd.f32 0.0, %v1951
        %v1953 = vpop.f32.mrf.mxu0
        %v1954 = vadd.f32 0.0, %v1953
        %1955 = vmatmul.bf16.gmra.mxu0 %v1001
        %v1956 = vpop.f32.mrf.mxu0
        %v1957 = vadd.f32 0.0, %v1956
        %v1958 = vpop.f32.mrf.mxu0
        %v1959 = vadd.f32 0.0, %v1958
        %1960 = vmatmul.bf16.gmra.mxu0 %v1004
        %v1961 = vpop.f32.mrf.mxu0
        %v1962 = vadd.f32 0.0, %v1961
        %v1963 = vpop.f32.mrf.mxu0
        %v1964 = vadd.f32 0.0, %v1963
        %1965 = vmatmul.bf16.gmra.mxu0 %v1007
        %v1966 = vpop.f32.mrf.mxu0
        %v1967 = vadd.f32 0.0, %v1966
        %v1968 = vpop.f32.mrf.mxu0
        %v1969 = vadd.f32 0.0, %v1968
        %1970 = vmatmul.bf16.gmra.mxu0 %v1010
        %v1971 = vpop.f32.mrf.mxu0
        %v1972 = vadd.f32 0.0, %v1971
        %v1973 = vpop.f32.mrf.mxu0
        %v1974 = vadd.f32 0.0, %v1973
        %1975 = vmatmul.bf16.gmra.mxu0 %v1013
        %v1976 = vpop.f32.mrf.mxu0
        %v1977 = vadd.f32 0.0, %v1976
        %v1978 = vpop.f32.mrf.mxu0
        %v1979 = vadd.f32 0.0, %v1978
        %1980 = vmatmul.bf16.gmra.mxu0 %v1016
        %v1981 = vpop.f32.mrf.mxu0
        %v1982 = vadd.f32 0.0, %v1981
        %v1983 = vpop.f32.mrf.mxu0
        %v1984 = vadd.f32 0.0, %v1983
        %1985 = vmatmul.bf16.gmra.mxu0 %v1019
        %v1986 = vpop.f32.mrf.mxu0
        %v1987 = vadd.f32 0.0, %v1986
        %v1988 = vpop.f32.mrf.mxu0
        %v1989 = vadd.f32 0.0, %v1988
        %1990 = vmatmul.bf16.gmra.mxu0 %v1476
        %v1991 = vpop.f32.mrf.mxu0
        %v1992 = vadd.f32 0.0, %v1991
        %v1993 = vpop.f32.mrf.mxu0
        %v1994 = vadd.f32 0.0, %v1993
        %1995 = vmatmul.bf16.gmra.mxu0 %v1907
        %v1996 = vpop.f32.mrf.mxu0
        %v1997 = vadd.f32 0.0, %v1996
        %v1998 = vpop.f32.mrf.mxu0
        %v1999 = vadd.f32 0.0, %v1998
        %2000 = vdwg.mxu0
        %v2001 = vadd.f32 %v1868, %v1922
        %v2002 = vadd.f32 %v1869, %v1924
        %v2003 = vadd.f32 %v1870, %v1927
        %v2004 = vadd.f32 %v1871, %v1929
        %v2005 = vadd.f32 %v1872, %v1932
        %v2006 = vadd.f32 %v1873, %v1934
        %v2007 = vadd.f32 %v1874, %v1937
        %v2008 = vadd.f32 %v1875, %v1939
        %v2009 = vadd.f32 %v1876, %v1942
        %v2010 = vadd.f32 %v1877, %v1944
        %v2011 = vadd.f32 %v1878, %v1947
        %v2012 = vadd.f32 %v1879, %v1949
        %v2013 = vadd.f32 %v1880, %v1952
        %v2014 = vadd.f32 %v1881, %v1954
        %v2015 = vadd.f32 %v1882, %v1957
        %v2016 = vadd.f32 %v1883, %v1959
        %v2017 = vadd.f32 %v1884, %v1962
        %v2018 = vadd.f32 %v1885, %v1964
        %v2019 = vadd.f32 %v1886, %v1967
        %v2020 = vadd.f32 %v1887, %v1969
        %v2021 = vadd.f32 %v1888, %v1972
        %v2022 = vadd.f32 %v1889, %v1974
        %v2023 = vadd.f32 %v1890, %v1977
        %v2024 = vadd.f32 %v1891, %v1979
        %v2025 = vadd.f32 %v1892, %v1982
        %v2026 = vadd.f32 %v1893, %v1984
        %v2027 = vadd.f32 %v1894, %v1987
        %v2028 = vadd.f32 %v1895, %v1989
        %v2029 = vadd.f32 %v1896, %v1992
        %v2030 = vadd.f32 %v1897, %v1994
        %v2031 = vadd.f32 %v1898, %v1997
        %v2032 = vadd.f32 %v1899, %v1999
        %v2034 = vshrl.u32 %v307, 16
        %v2036 = vrot.slane %v2034, 4
        %v2037 = vshll.u32 %v307, 16
        %v2039 = vrot.slane %v2037, 5
        %v2040 = vor.u32 %v2036, %v2039
        %v2041 = vrot.slane %v2040, 4
        %v2043 = vshll.u32 %v308, 16
        %v2045 = vrot.slane %v2043, 5
        %v2046 = vsel %vm313, %v2041, %v2045
        %v2047 = vshrl.u32 %v308, 16
        %v2049 = vrot.slane %v2047, 4
        %v2050 = vor.u32 %v2049, %v2045
        %v2051 = vrot.slane %v2050, 4
        %v2053 = vshll.u32 %v309, 16
        %v2055 = vrot.slane %v2053, 5
        %v2056 = vsel %vm313, %v2051, %v2055
        %v2057 = vld [vmem:[%s248 + $0xc] sm:$0xc]
        %v2058 = vunpack.c.l.b16 %v2046
        %v2059 = vunpack.c.l.b16 %v2056
        %v2060 = vpack.c.b16 %v2059, %v2058
        %v2062 = vunpack.c.l.b16 %v2057
        %v2063 = vpack.c.b16 %v2062, %v2062
        %v2064 = vrot.slane %v2063, 2
        %v2066 = vsel %vm751, %v2060, 0
        %v2069 = vsel %vm800, %v2064, 0
        %2071 = vmatpush.bf16.msra.mxu0 0
        %2072 = vmatpush.bf16.msra.mxu0 0
        %2073 = vmatpush.bf16.msra.mxu0 0
        %2074 = vmatpush.bf16.msra.mxu0 0
        %2075 = vmatpush.bf16.msra.mxu0 0
        %2076 = vmatpush.bf16.msra.mxu0 0
        %2077 = vmatpush.bf16.msra.mxu0 0
        %2078 = vmatpush.bf16.msra.mxu0 %v2069
        %2079 = vmatmul.bf16.gmra.mxu0 %v759
        %v2080 = vpop.f32.mrf.mxu0
        %v2081 = vadd.f32 0.0, %v2080
        %v2082 = vpop.f32.mrf.mxu0
        %v2083 = vadd.f32 0.0, %v2082
        %2084 = vmatmul.bf16.gmra.mxu0 %v762
        %v2085 = vpop.f32.mrf.mxu0
        %v2086 = vadd.f32 0.0, %v2085
        %v2087 = vpop.f32.mrf.mxu0
        %v2088 = vadd.f32 0.0, %v2087
        %2089 = vmatmul.bf16.gmra.mxu0 %v765
        %v2090 = vpop.f32.mrf.mxu0
        %v2091 = vadd.f32 0.0, %v2090
        %v2092 = vpop.f32.mrf.mxu0
        %v2093 = vadd.f32 0.0, %v2092
        %2094 = vmatmul.bf16.gmra.mxu0 %v768
        %v2095 = vpop.f32.mrf.mxu0
        %v2096 = vadd.f32 0.0, %v2095
        %v2097 = vpop.f32.mrf.mxu0
        %v2098 = vadd.f32 0.0, %v2097
        %2099 = vmatmul.bf16.gmra.mxu0 %v771
        %v2100 = vpop.f32.mrf.mxu0
        %v2101 = vadd.f32 0.0, %v2100
        %v2102 = vpop.f32.mrf.mxu0
        %v2103 = vadd.f32 0.0, %v2102
        %2104 = vmatmul.bf16.gmra.mxu0 %v774
        %v2105 = vpop.f32.mrf.mxu0
        %v2106 = vadd.f32 0.0, %v2105
        %v2107 = vpop.f32.mrf.mxu0
        %v2108 = vadd.f32 0.0, %v2107
        %2109 = vmatmul.bf16.gmra.mxu0 %v777
        %v2110 = vpop.f32.mrf.mxu0
        %v2111 = vadd.f32 0.0, %v2110
        %v2112 = vpop.f32.mrf.mxu0
        %v2113 = vadd.f32 0.0, %v2112
        %2114 = vmatmul.bf16.gmra.mxu0 %v780
        %v2115 = vpop.f32.mrf.mxu0
        %v2116 = vadd.f32 0.0, %v2115
        %v2117 = vpop.f32.mrf.mxu0
        %v2118 = vadd.f32 0.0, %v2117
        %2119 = vmatmul.bf16.gmra.mxu0 %v783
        %v2120 = vpop.f32.mrf.mxu0
        %v2121 = vadd.f32 0.0, %v2120
        %v2122 = vpop.f32.mrf.mxu0
        %v2123 = vadd.f32 0.0, %v2122
        %2124 = vmatmul.bf16.gmra.mxu0 %v786
        %v2125 = vpop.f32.mrf.mxu0
        %v2126 = vadd.f32 0.0, %v2125
        %v2127 = vpop.f32.mrf.mxu0
        %v2128 = vadd.f32 0.0, %v2127
        %2129 = vmatmul.bf16.gmra.mxu0 %v789
        %v2130 = vpop.f32.mrf.mxu0
        %v2131 = vadd.f32 0.0, %v2130
        %v2132 = vpop.f32.mrf.mxu0
        %v2133 = vadd.f32 0.0, %v2132
        %2134 = vmatmul.bf16.gmra.mxu0 %v792
        %v2135 = vpop.f32.mrf.mxu0
        %v2136 = vadd.f32 0.0, %v2135
        %v2137 = vpop.f32.mrf.mxu0
        %v2138 = vadd.f32 0.0, %v2137
        %2139 = vmatmul.bf16.gmra.mxu0 %v795
        %v2140 = vpop.f32.mrf.mxu0
        %v2141 = vadd.f32 0.0, %v2140
        %v2142 = vpop.f32.mrf.mxu0
        %v2143 = vadd.f32 0.0, %v2142
        %2144 = vmatmul.bf16.gmra.mxu0 %v798
        %v2145 = vpop.f32.mrf.mxu0
        %v2146 = vadd.f32 0.0, %v2145
        %v2147 = vpop.f32.mrf.mxu0
        %v2148 = vadd.f32 0.0, %v2147
        %2149 = vmatmul.bf16.gmra.mxu0 %v1631
        %v2150 = vpop.f32.mrf.mxu0
        %v2151 = vadd.f32 0.0, %v2150
        %v2152 = vpop.f32.mrf.mxu0
        %v2153 = vadd.f32 0.0, %v2152
        %2154 = vmatmul.bf16.gmra.mxu0 %v2066
        %v2155 = vpop.f32.mrf.mxu0
        %v2156 = vadd.f32 0.0, %v2155
        %v2157 = vpop.f32.mrf.mxu0
        %v2158 = vadd.f32 0.0, %v2157
        %2159 = vdwg.mxu0
        %v2160 = vadd.f32 %v2001, %v2081
        %v2161 = vadd.f32 %v2002, %v2083
        %v2162 = vadd.f32 %v2003, %v2086
        %v2163 = vadd.f32 %v2004, %v2088
        %v2164 = vadd.f32 %v2005, %v2091
        %v2165 = vadd.f32 %v2006, %v2093
        %v2166 = vadd.f32 %v2007, %v2096
        %v2167 = vadd.f32 %v2008, %v2098
        %v2168 = vadd.f32 %v2009, %v2101
        %v2169 = vadd.f32 %v2010, %v2103
        %v2170 = vadd.f32 %v2011, %v2106
        %v2171 = vadd.f32 %v2012, %v2108
        %v2172 = vadd.f32 %v2013, %v2111
        %v2173 = vadd.f32 %v2014, %v2113
        %v2174 = vadd.f32 %v2015, %v2116
        %v2175 = vadd.f32 %v2016, %v2118
        %v2176 = vadd.f32 %v2017, %v2121
        %v2177 = vadd.f32 %v2018, %v2123
        %v2178 = vadd.f32 %v2019, %v2126
        %v2179 = vadd.f32 %v2020, %v2128
        %v2180 = vadd.f32 %v2021, %v2131
        %v2181 = vadd.f32 %v2022, %v2133
        %v2182 = vadd.f32 %v2023, %v2136
        %v2183 = vadd.f32 %v2024, %v2138
        %v2184 = vadd.f32 %v2025, %v2141
        %v2185 = vadd.f32 %v2026, %v2143
        %v2186 = vadd.f32 %v2027, %v2146
        %v2187 = vadd.f32 %v2028, %v2148
        %v2188 = vadd.f32 %v2029, %v2151
        %v2189 = vadd.f32 %v2030, %v2153
        %v2190 = vadd.f32 %v2031, %v2156
        %v2191 = vadd.f32 %v2032, %v2158
        %v2193 = vrot.slane %v307, 5
        %v2194 = vrot.slane %v2193, 4
        %v2195 = vrot.slane %v308, 5
        %v2196 = vsel %vm1131, %v2194, %v2195
        %v2197 = vrot.slane %v2195, 4
        %v2198 = vrot.slane %v309, 5
        %v2199 = vsel %vm1131, %v2197, %v2198
        %v2200 = vld [vmem:[%s248 + $0x10] sm:$0x3]
        %v2201 = vunpack.c.l.b16 %v2196
        %v2202 = vunpack.c.l.b16 %v2199
        %v2203 = vpack.c.b16 %v2202, %v2201
        %v2205 = vsel %vm751, %v2203, 0
        %v2208 = vsel %vm800, %v2200, 0
        %2210 = vmatpush.bf16.msra.mxu0 0
        %2211 = vmatpush.bf16.msra.mxu0 0
        %2212 = vmatpush.bf16.msra.mxu0 0
        %2213 = vmatpush.bf16.msra.mxu0 0
        %2214 = vmatpush.bf16.msra.mxu0 0
        %2215 = vmatpush.bf16.msra.mxu0 0
        %2216 = vmatpush.bf16.msra.mxu0 0
        %2217 = vmatpush.bf16.msra.mxu0 %v2208
        %2218 = vmatmul.bf16.gmra.mxu0 %v1300
        %v2219 = vpop.f32.mrf.mxu0
        %v2220 = vadd.f32 0.0, %v2219
        %v2221 = vpop.f32.mrf.mxu0
        %v2222 = vadd.f32 0.0, %v2221
        %2223 = vmatmul.bf16.gmra.mxu0 %v1303
        %v2224 = vpop.f32.mrf.mxu0
        %v2225 = vadd.f32 0.0, %v2224
        %v2226 = vpop.f32.mrf.mxu0
        %v2227 = vadd.f32 0.0, %v2226
        %2228 = vmatmul.bf16.gmra.mxu0 %v1306
        %v2229 = vpop.f32.mrf.mxu0
        %v2230 = vadd.f32 0.0, %v2229
        %v2231 = vpop.f32.mrf.mxu0
        %v2232 = vadd.f32 0.0, %v2231
        %2233 = vmatmul.bf16.gmra.mxu0 %v1309
        %v2234 = vpop.f32.mrf.mxu0
        %v2235 = vadd.f32 0.0, %v2234
        %v2236 = vpop.f32.mrf.mxu0
        %v2237 = vadd.f32 0.0, %v2236
        %2238 = vmatmul.bf16.gmra.mxu0 %v1312
        %v2239 = vpop.f32.mrf.mxu0
        %v2240 = vadd.f32 0.0, %v2239
        %v2241 = vpop.f32.mrf.mxu0
        %v2242 = vadd.f32 0.0, %v2241
        %2243 = vmatmul.bf16.gmra.mxu0 %v1315
        %v2244 = vpop.f32.mrf.mxu0
        %v2245 = vadd.f32 0.0, %v2244
        %v2246 = vpop.f32.mrf.mxu0
        %v2247 = vadd.f32 0.0, %v2246
        %2248 = vmatmul.bf16.gmra.mxu0 %v1318
        %v2249 = vpop.f32.mrf.mxu0
        %v2250 = vadd.f32 0.0, %v2249
        %v2251 = vpop.f32.mrf.mxu0
        %v2252 = vadd.f32 0.0, %v2251
        %2253 = vmatmul.bf16.gmra.mxu0 %v1321
        %v2254 = vpop.f32.mrf.mxu0
        %v2255 = vadd.f32 0.0, %v2254
        %v2256 = vpop.f32.mrf.mxu0
        %v2257 = vadd.f32 0.0, %v2256
        %2258 = vmatmul.bf16.gmra.mxu0 %v1324
        %v2259 = vpop.f32.mrf.mxu0
        %v2260 = vadd.f32 0.0, %v2259
        %v2261 = vpop.f32.mrf.mxu0
        %v2262 = vadd.f32 0.0, %v2261
        %2263 = vmatmul.bf16.gmra.mxu0 %v1327
        %v2264 = vpop.f32.mrf.mxu0
        %v2265 = vadd.f32 0.0, %v2264
        %v2266 = vpop.f32.mrf.mxu0
        %v2267 = vadd.f32 0.0, %v2266
        %2268 = vmatmul.bf16.gmra.mxu0 %v1330
        %v2269 = vpop.f32.mrf.mxu0
        %v2270 = vadd.f32 0.0, %v2269
        %v2271 = vpop.f32.mrf.mxu0
        %v2272 = vadd.f32 0.0, %v2271
        %2273 = vmatmul.bf16.gmra.mxu0 %v1333
        %v2274 = vpop.f32.mrf.mxu0
        %v2275 = vadd.f32 0.0, %v2274
        %v2276 = vpop.f32.mrf.mxu0
        %v2277 = vadd.f32 0.0, %v2276
        %2278 = vmatmul.bf16.gmra.mxu0 %v1336
        %v2279 = vpop.f32.mrf.mxu0
        %v2280 = vadd.f32 0.0, %v2279
        %v2281 = vpop.f32.mrf.mxu0
        %v2282 = vadd.f32 0.0, %v2281
        %2283 = vmatmul.bf16.gmra.mxu0 %v1339
        %v2284 = vpop.f32.mrf.mxu0
        %v2285 = vadd.f32 0.0, %v2284
        %v2286 = vpop.f32.mrf.mxu0
        %v2287 = vadd.f32 0.0, %v2286
        %2288 = vmatmul.bf16.gmra.mxu0 %v1774
        %v2289 = vpop.f32.mrf.mxu0
        %v2290 = vadd.f32 0.0, %v2289
        %v2291 = vpop.f32.mrf.mxu0
        %v2292 = vadd.f32 0.0, %v2291
        %2293 = vmatmul.bf16.gmra.mxu0 %v2205
        %v2294 = vpop.f32.mrf.mxu0
        %v2295 = vadd.f32 0.0, %v2294
        %v2296 = vpop.f32.mrf.mxu0
        %v2297 = vadd.f32 0.0, %v2296
        %2298 = vdwg.mxu0
        %v2299 = vadd.f32 %v2160, %v2220
        %v2300 = vadd.f32 %v2161, %v2222
        %v2301 = vadd.f32 %v2162, %v2225
        %v2302 = vadd.f32 %v2163, %v2227
        %v2303 = vadd.f32 %v2164, %v2230
        %v2304 = vadd.f32 %v2165, %v2232
        %v2305 = vadd.f32 %v2166, %v2235
        %v2306 = vadd.f32 %v2167, %v2237
        %v2307 = vadd.f32 %v2168, %v2240
        %v2308 = vadd.f32 %v2169, %v2242
        %v2309 = vadd.f32 %v2170, %v2245
        %v2310 = vadd.f32 %v2171, %v2247
        %v2311 = vadd.f32 %v2172, %v2250
        %v2312 = vadd.f32 %v2173, %v2252
        %v2313 = vadd.f32 %v2174, %v2255
        %v2314 = vadd.f32 %v2175, %v2257
        %v2315 = vadd.f32 %v2176, %v2260
        %v2316 = vadd.f32 %v2177, %v2262
        %v2317 = vadd.f32 %v2178, %v2265
        %v2318 = vadd.f32 %v2179, %v2267
        %v2319 = vadd.f32 %v2180, %v2270
        %v2320 = vadd.f32 %v2181, %v2272
        %v2321 = vadd.f32 %v2182, %v2275
        %v2322 = vadd.f32 %v2183, %v2277
        %v2323 = vadd.f32 %v2184, %v2280
        %v2324 = vadd.f32 %v2185, %v2282
        %v2325 = vadd.f32 %v2186, %v2285
        %v2326 = vadd.f32 %v2187, %v2287
        %v2327 = vadd.f32 %v2188, %v2290
        %v2328 = vadd.f32 %v2189, %v2292
        %v2329 = vadd.f32 %v2190, %v2295
        %v2330 = vadd.f32 %v2191, %v2297
        %v2331 = vld [vmem:[%s251] sm:$0x1]
        %v2333 = vperm.slane %v2331, 0
        %v2335 = vmul.f32 %v2299, %v2333
        %v2336 = vmul.f32 %v2300, %v2333
        %v2337 = vmul.f32 %v2301, %v2333
        %v2338 = vmul.f32 %v2302, %v2333
        %v2339 = vmul.f32 %v2303, %v2333
        %v2340 = vmul.f32 %v2304, %v2333
        %v2341 = vmul.f32 %v2305, %v2333
        %v2342 = vmul.f32 %v2306, %v2333
        %v2343 = vmul.f32 %v2307, %v2333
        %v2344 = vmul.f32 %v2308, %v2333
        %v2345 = vmul.f32 %v2309, %v2333
        %v2346 = vmul.f32 %v2310, %v2333
        %v2347 = vmul.f32 %v2311, %v2333
        %v2348 = vmul.f32 %v2312, %v2333
        %v2349 = vmul.f32 %v2313, %v2333
        %v2350 = vmul.f32 %v2314, %v2333
        %v2351 = vmul.f32 %v2315, %v2333
        %v2352 = vmul.f32 %v2316, %v2333
        %v2353 = vmul.f32 %v2317, %v2333
        %v2354 = vmul.f32 %v2318, %v2333
        %v2355 = vmul.f32 %v2319, %v2333
        %v2356 = vmul.f32 %v2320, %v2333
        %v2357 = vmul.f32 %v2321, %v2333
        %v2358 = vmul.f32 %v2322, %v2333
        %v2359 = vmul.f32 %v2323, %v2333
        %v2360 = vmul.f32 %v2324, %v2333
        %v2361 = vmul.f32 %v2325, %v2333
        %v2362 = vmul.f32 %v2326, %v2333
        %v2363 = vmul.f32 %v2327, %v2333
        %v2364 = vmul.f32 %v2328, %v2333
        %v2365 = vmul.f32 %v2329, %v2333
        %v2366 = vmul.f32 %v2330, %v2333
        %v2367 = vld [vmem:[%s254] sm:$0x1]
        %v2369 = vperm.slane %v2367, 0
        %v2371 = vadd.f32 %v2335, %v2369
        %v2372 = vadd.f32 %v2336, %v2369
        %v2373 = vadd.f32 %v2337, %v2369
        %v2374 = vadd.f32 %v2338, %v2369
        %v2375 = vadd.f32 %v2339, %v2369
        %v2376 = vadd.f32 %v2340, %v2369
        %v2377 = vadd.f32 %v2341, %v2369
        %v2378 = vadd.f32 %v2342, %v2369
        %v2379 = vadd.f32 %v2343, %v2369
        %v2380 = vadd.f32 %v2344, %v2369
        %v2381 = vadd.f32 %v2345, %v2369
        %v2382 = vadd.f32 %v2346, %v2369
        %v2383 = vadd.f32 %v2347, %v2369
        %v2384 = vadd.f32 %v2348, %v2369
        %v2385 = vadd.f32 %v2349, %v2369
        %v2386 = vadd.f32 %v2350, %v2369
        %v2387 = vadd.f32 %v2351, %v2369
        %v2388 = vadd.f32 %v2352, %v2369
        %v2389 = vadd.f32 %v2353, %v2369
        %v2390 = vadd.f32 %v2354, %v2369
        %v2391 = vadd.f32 %v2355, %v2369
        %v2392 = vadd.f32 %v2356, %v2369
        %v2393 = vadd.f32 %v2357, %v2369
        %v2394 = vadd.f32 %v2358, %v2369
        %v2395 = vadd.f32 %v2359, %v2369
        %v2396 = vadd.f32 %v2360, %v2369
        %v2397 = vadd.f32 %v2361, %v2369
        %v2398 = vadd.f32 %v2362, %v2369
        %v2399 = vadd.f32 %v2363, %v2369
        %v2400 = vadd.f32 %v2364, %v2369
        %v2401 = vadd.f32 %v2365, %v2369
        %v2402 = vadd.f32 %v2366, %v2369
        %v2403 = vmax.f32 %v2371, 0.0
        %v2404 = vmax.f32 %v2372, 0.0
        %v2405 = vmax.f32 %v2373, 0.0
        %v2406 = vmax.f32 %v2374, 0.0
        %v2407 = vmax.f32 %v2375, 0.0
        %v2408 = vmax.f32 %v2376, 0.0
        %v2409 = vmax.f32 %v2377, 0.0
        %v2410 = vmax.f32 %v2378, 0.0
        %v2411 = vmax.f32 %v2379, 0.0
        %v2412 = vmax.f32 %v2380, 0.0
        %v2413 = vmax.f32 %v2381, 0.0
        %v2414 = vmax.f32 %v2382, 0.0
        %v2415 = vmax.f32 %v2383, 0.0
        %v2416 = vmax.f32 %v2384, 0.0
        %v2417 = vmax.f32 %v2385, 0.0
        %v2418 = vmax.f32 %v2386, 0.0
        %v2419 = vmax.f32 %v2387, 0.0
        %v2420 = vmax.f32 %v2388, 0.0
        %v2421 = vmax.f32 %v2389, 0.0
        %v2422 = vmax.f32 %v2390, 0.0
        %v2423 = vmax.f32 %v2391, 0.0
        %v2424 = vmax.f32 %v2392, 0.0
        %v2425 = vmax.f32 %v2393, 0.0
        %v2426 = vmax.f32 %v2394, 0.0
        %v2427 = vmax.f32 %v2395, 0.0
        %v2428 = vmax.f32 %v2396, 0.0
        %v2429 = vmax.f32 %v2397, 0.0
        %v2430 = vmax.f32 %v2398, 0.0
        %v2431 = vmax.f32 %v2399, 0.0
        %v2432 = vmax.f32 %v2400, 0.0
        %v2433 = vmax.f32 %v2401, 0.0
        %v2434 = vmax.f32 %v2402, 0.0
        %v2435 = vpack.c.bf16 %v2403, %v2403
        %v2436 = vpack.c.bf16 %v2404, %v2404
        %v2437 = vpack.c.bf16 %v2405, %v2405
        %v2438 = vpack.c.bf16 %v2406, %v2406
        %v2439 = vpack.c.bf16 %v2407, %v2407
        %v2440 = vpack.c.bf16 %v2408, %v2408
        %v2441 = vpack.c.bf16 %v2409, %v2409
        %v2442 = vpack.c.bf16 %v2410, %v2410
        %v2443 = vpack.c.bf16 %v2411, %v2411
        %v2444 = vpack.c.bf16 %v2412, %v2412
        %v2445 = vpack.c.bf16 %v2413, %v2413
        %v2446 = vpack.c.bf16 %v2414, %v2414
        %v2447 = vpack.c.bf16 %v2415, %v2415
        %v2448 = vpack.c.bf16 %v2416, %v2416
        %v2449 = vpack.c.bf16 %v2417, %v2417
        %v2450 = vpack.c.bf16 %v2418, %v2418
        %v2451 = vpack.c.bf16 %v2419, %v2419
        %v2452 = vpack.c.bf16 %v2420, %v2420
        %v2453 = vpack.c.bf16 %v2421, %v2421
        %v2454 = vpack.c.bf16 %v2422, %v2422
        %v2455 = vpack.c.bf16 %v2423, %v2423
        %v2456 = vpack.c.bf16 %v2424, %v2424
        %v2457 = vpack.c.bf16 %v2425, %v2425
        %v2458 = vpack.c.bf16 %v2426, %v2426
        %v2459 = vpack.c.bf16 %v2427, %v2427
        %v2460 = vpack.c.bf16 %v2428, %v2428
        %v2461 = vpack.c.bf16 %v2429, %v2429
        %v2462 = vpack.c.bf16 %v2430, %v2430
        %v2463 = vpack.c.bf16 %v2431, %v2431
        %v2464 = vpack.c.bf16 %v2432, %v2432
        %v2465 = vpack.c.bf16 %v2433, %v2433
        %v2466 = vpack.c.bf16 %v2434, %v2434
        %vm2467 = vcmask 257024
        %2468 = vst.msk [vmem:[%s239] sm:$0xf] %vm2467, %v2435
        %2469 = vst.msk [vmem:[%s239 + $0x4] sm:$0xf] %vm2467, %v2436
        %2470 = vst.msk [vmem:[%s239 + $0x8] sm:$0xf] %vm2467, %v2437
        %2471 = vst.msk [vmem:[%s239 + $0xc] sm:$0xf] %vm2467, %v2438
        %2472 = vst.msk [vmem:[%s239 + $0x10] sm:$0xf] %vm2467, %v2439
        %2473 = vst.msk [vmem:[%s239 + $0x14] sm:$0xf] %vm2467, %v2440
        %2474 = vst.msk [vmem:[%s239 + $0x18] sm:$0xf] %vm2467, %v2441
        %2475 = vst.msk [vmem:[%s239 + $0x1c] sm:$0xf] %vm2467, %v2442
        %2476 = vst.msk [vmem:[%s239 + $0x20] sm:$0xf] %vm2467, %v2443
        %2477 = vst.msk [vmem:[%s239 + $0x24] sm:$0xf] %vm2467, %v2444
        %2478 = vst.msk [vmem:[%s239 + $0x28] sm:$0xf] %vm2467, %v2445
        %2479 = vst.msk [vmem:[%s239 + $0x2c] sm:$0xf] %vm2467, %v2446
        %2480 = vst.msk [vmem:[%s239 + $0x30] sm:$0xf] %vm2467, %v2447
        %2481 = vst.msk [vmem:[%s239 + $0x34] sm:$0xf] %vm2467, %v2448
        %2482 = vst.msk [vmem:[%s239 + $0x38] sm:$0xf] %vm2467, %v2449
        %2483 = vst.msk [vmem:[%s239 + $0x3c] sm:$0xf] %vm2467, %v2450
        %2484 = vst.msk [vmem:[%s239 + $0x40] sm:$0xf] %vm2467, %v2451
        %2485 = vst.msk [vmem:[%s239 + $0x44] sm:$0xf] %vm2467, %v2452
        %2486 = vst.msk [vmem:[%s239 + $0x48] sm:$0xf] %vm2467, %v2453
        %2487 = vst.msk [vmem:[%s239 + $0x4c] sm:$0xf] %vm2467, %v2454
        %2488 = vst.msk [vmem:[%s239 + $0x50] sm:$0xf] %vm2467, %v2455
        %2489 = vst.msk [vmem:[%s239 + $0x54] sm:$0xf] %vm2467, %v2456
        %2490 = vst.msk [vmem:[%s239 + $0x58] sm:$0xf] %vm2467, %v2457
        %2491 = vst.msk [vmem:[%s239 + $0x5c] sm:$0xf] %vm2467, %v2458
        %2492 = vst.msk [vmem:[%s239 + $0x60] sm:$0xf] %vm2467, %v2459
        %2493 = vst.msk [vmem:[%s239 + $0x64] sm:$0xf] %vm2467, %v2460
        %2494 = vst.msk [vmem:[%s239 + $0x68] sm:$0xf] %vm2467, %v2461
        %2495 = vst.msk [vmem:[%s239 + $0x6c] sm:$0xf] %vm2467, %v2462
        %2496 = vst.msk [vmem:[%s239 + $0x70] sm:$0xf] %vm2467, %v2463
        %2497 = vst.msk [vmem:[%s239 + $0x74] sm:$0xf] %vm2467, %v2464
        %2498 = vst.msk [vmem:[%s239 + $0x78] sm:$0xf] %vm2467, %v2465
        %2499 = vst.msk [vmem:[%s239 + $0x7c] sm:$0xf] %vm2467, %v2466
        %s2500 = sand.u32 %s144, 1
        %s2501 = scalar_lea.sflag [#allocation3], %s2500
        %s2502 = sand.u32 %s144, 1
        %s2503 = smul.addr %s2502, 128
        %s2504 = scalar_lea.vmem [#allocation2], %s2503
        // Predicated region
        $region37: #{tpu_custom_call.1} parent=35 // pred_check
          %p2505 = pneg %p154
        $region38: #{tpu_custom_call.1} parent=35 // pred_check_branch
          %2507 = sbr.rel (%p2505) target = $region40
        $region39: #{tpu_custom_call.1} parent=35 // pred_region
          %2509 = vsyncadd %s2501, 0
          %s2510 = smul.addr %s22, 32
          %s2511 = sadd.s32 %s23, %s2510
          %s2512 = smul.addr %s2511, 4
          %s2513 = scalar_lea.hbm %s4, %s2512
          %s2514 = sshll.u32 %s2504, 4
          %s2515 = int_to_ptr.vmem [resolvable:$true] %s2514
          %s2516 = sshll.u32 %s2513, 4
          %s2517 = int_to_ptr.hbm [resolvable:$true] %s2516
          %2522 = dma.vmem_to_hbm [thread:$0]  %s2515, 2048, %s2517, %s2501, 64, 64, 4
        $region40: #{tpu_custom_call.1} parent=35 // pred_fallthru
          _
      $region36: #{tpu_custom_call.1} parent=5 // pred_fallthru
        _
      %p2523 = scmp.le.s32.totalorder 2, %s13
      // Predicated region
      $region41: #{tpu_custom_call.1} parent=5 // pred_check
        %p2524 = pneg %p2523
      $region42: #{tpu_custom_call.1} parent=5 // pred_check_branch
        %2526 = sbr.rel (%p2524) target = $region44
      $region43: #{tpu_custom_call.1} parent=5 // pred_region
        %s2527 = ssub.s32 %s13, 2
        // Predicated region
        $region45: #{tpu_custom_call.1} parent=43 // pred_check
          %p2528 = pneg %p160
        $region46: #{tpu_custom_call.1} parent=43 // pred_check_branch
          %2530 = sbr.rel (%p2528) target = $region48
        $region47: #{tpu_custom_call.1} parent=43 // pred_region
          %s2531 = sand.u32 %s145, 1
          %s2532 = scalar_lea.sflag [#allocation3], %s2531
          %s2533 = sand.u32 %s145, 1
          %s2534 = smul.addr %s2533, 128
          %s2535 = scalar_lea.vmem [#allocation2], %s2534
          %2537 = dma.done %s2532, 2048
        $region48: #{tpu_custom_call.1} parent=43 // pred_fallthru
          _
      $region44: #{tpu_custom_call.1} parent=5 // pred_fallthru
        _
    $region6: #{tpu_custom_call.1} parent=1 // loop_footer
      %s17 = sadd.s32 1, %s13
    $region7: #{tpu_custom_call.1} parent=1 // loop_footer_branch
      %12 = sbr.rel target = $region3
    $region8: #{tpu_custom_call.1} parent=1 // loop_exit
      _
    %2538 = vsyncpa [#allocation3], 1
    %s2539 = scalar_lea.sflag [#allocation3], 1
    %2540 = vsyncpa %s2539, 1

</llo_original>
